<compile_context>
chip_gen: v6e
topology: v6e:2x2x1
jax: 0.10.0
libtpu: 0.0.40
codegen_flags: <defaults>
</compile_context>

<pallas_src>
import functools

import jax
import jax.numpy as jnp
from jax.experimental import pallas as pl
from jax.experimental.pallas import tpu as pltpu


# ----------------------------------------------------------------------------
# Kernels (all math in f32 after MXU accumulation; cast only at the store)
# ----------------------------------------------------------------------------

def _finish(mode, yc, yi, x_out_ref, xi_out_ref):
    if mode == 0:
        # x      = relu(bn_conv(conv(x)))
        x_out_ref[...] = jnp.maximum(yc, 0.0).astype(x_out_ref.dtype)
    else:
        # modes 1/2/3: x = bn_conv(conv(x)) * (bn_init(conv_init(x_init)) > 0)
        x_out_ref[...] = jnp.where(yi > 0.0, yc, 0.0).astype(x_out_ref.dtype)
    # x_init = relu(bn_init(conv_init(x_init)))  (all modes)
    xi_out_ref[...] = jnp.maximum(yi, 0.0).astype(xi_out_ref.dtype)


def _one_matmul_kernel(mode, p_ref, w_ref, sc_ref, bc_ref, si_ref, bi_ref,
                       x_out_ref, xi_out_ref):
    # Shared weights AND shared input: one MXU matmul, two per-channel affines.
    y = jnp.dot(p_ref[...], w_ref[...], preferred_element_type=jnp.float32)
    yc = y * sc_ref[...] + bc_ref[...]
    yi = y * si_ref[...] + bi_ref[...]
    _finish(mode, yc, yi, x_out_ref, xi_out_ref)


def _two_matmul_shared_p_kernel(mode, p_ref, wc_ref, wi_ref,
                                sc_ref, bc_ref, si_ref, bi_ref,
                                x_out_ref, xi_out_ref):
    # Same patches, different weights. BN affine applied in f32 post-accum.
    yc = jnp.dot(p_ref[...], wc_ref[...],
                 preferred_element_type=jnp.float32) * sc_ref[...] + bc_ref[...]
    yi = jnp.dot(p_ref[...], wi_ref[...],
                 preferred_element_type=jnp.float32) * si_ref[...] + bi_ref[...]
    _finish(mode, yc, yi, x_out_ref, xi_out_ref)


def _two_matmul_kernel(mode, p_ref, pi_ref, wc_ref, wi_ref,
                       sc_ref, bc_ref, si_ref, bi_ref,
                       x_out_ref, xi_out_ref):
    # Fully distinct streams (explicit x_init).
    yc = jnp.dot(p_ref[...], wc_ref[...],
                 preferred_element_type=jnp.float32) * sc_ref[...] + bc_ref[...]
    yi = jnp.dot(pi_ref[...], wi_ref[...],
                 preferred_element_type=jnp.float32) * si_ref[...] + bi_ref[...]
    _finish(mode, yc, yi, x_out_ref, xi_out_ref)


# ----------------------------------------------------------------------------
# Wrapper helpers
# ----------------------------------------------------------------------------

def _im2col_nchw(x_nchw, ksize, stride, padding):
    """NCHW -> (N*Ho*Wo, KH*KW*Cin) patch matrix (taps (kh,kw) outer, channel fastest)."""
    n, c, h, w = x_nchw.shape
    x = jnp.transpose(x_nchw, (0, 2, 3, 1))                      # NHWC
    x = jnp.pad(x, ((0, 0), (padding, padding), (padding, padding), (0, 0)))
    hout = (h + 2 * padding - ksize) // stride + 1
    wout = (w + 2 * padding - ksize) // stride + 1
    taps = []
    for kh in range(ksize):
        for kw in range(ksize):
            taps.append(x[:, kh:kh + stride * hout:stride,
                          kw:kw + stride * wout:stride, :])
    p = jnp.stack(taps, axis=3)                                   # (N,Ho,Wo,KH*KW,C)
    return p.reshape(n * hout * wout, ksize * ksize * c), hout, wout


def _weight_to_matrix(w_oihw):
    """PyTorch (Cout,Cin,KH,KW) -> (KH*KW*Cin, Cout), matching im2col tap order."""
    cout, cin, kh, kw = w_oihw.shape
    return jnp.transpose(w_oihw, (2, 3, 1, 0)).reshape(kh * kw * cin, cout)


def _fold_bn(gamma, beta, mean, var, eps=1e-5):
    scale = (gamma / jnp.sqrt(var + eps)).astype(jnp.float32)
    shift = (beta - mean * scale).astype(jnp.float32)
    return scale, shift


def _round_up(x, m):
    return (x + m - 1) // m * m


def _ceil_div(a, b):
    return -(-a // b)


def _vmem_budget_bytes():
    """Per-generation VMEM budget / limit (v7x: 64 MiB physical; v5e/v6e: 128 MiB)."""
    cap = 64 << 20  # conservative fallback = v7x physical VMEM
    try:
        info = pltpu.get_tpu_info()
        c = getattr(info, "vmem_capacity_bytes", None)
        if c:
            cap = int(c)
    except Exception:
        pass
    budget = int(cap * 0.60)   # working-set target for tile picking
    limit = int(cap * 0.75)    # hard scoped-VMEM limit handed to Mosaic
    return budget, limit


def _pick_tile_m(m, k, cout, in_bytes, out_bytes, n_patch_streams,
                 n_weight_mats, resident_bufs, budget_bytes):
    """Largest M-tile whose pipelined working set fits the VMEM budget.

    Accounts for vreg lane padding (last dim padded to 128) and the real
    buffer count of the resident weights / BN rows.
    """
    m8 = _round_up(max(m, 8), 8)
    k_l = _round_up(k, 128)
    c_l = _round_up(cout, 128)

    def vmem_use(tm):
        ins = n_patch_streams * 2 * tm * k_l * in_bytes          # patch tiles, 2 bufs
        outs = 2 * 2 * tm * c_l * out_bytes                      # two outputs, 2 bufs
        wts = n_weight_mats * resident_bufs * k_l * c_l * in_bytes
        vecs = 4 * resident_bufs * 8 * c_l * 4                   # BN rows (sublane-padded)
        return ins + outs + wts + vecs

    tm = 8
    # <=1024: v5e sees diminishing returns past ~512-1024 and 85% roofline by 512.
    for cand in (1024, 512, 256, 128, 64, 32, 16, 8):
        t = min(cand, m8)
        if vmem_use(t) <= budget_bytes:
            tm = t
            break

    # Guarantee >=2 (ideally 4) tiles: v7x megacore needs >=2 for both TCs, and
    # a single tile would leave the DMA pipeline nothing to overlap.
    min_tiles = max(1, min(4, m8 // 8))
    tm = min(tm, max(8, _round_up(_ceil_div(m8, min_tiles), 8)))
    return tm


# ----------------------------------------------------------------------------
# Forward pass
# ----------------------------------------------------------------------------

def conv_two_stream_norm_fixbn(x, params, *, mode=0, stride=1, padding=1,
                               x_init=None, compute_dtype=jnp.bfloat16,
                               out_dtype=None, nhwc_output=False):
    """Forward pass of ConvTwoStreamNormFixBN. x, x_init are NCHW.

    out_dtype defaults to x.dtype; pass jnp.bfloat16 to halve output HBM writes.
    nhwc_output=True skips the NCHW transpose epilogue (returns NHWC) for
    channels-last consumers.
    """
    # NOTE: under jit a numerically-identical but distinct x_init takes the
    # (correct but slower) two-stream path; pass x_init=None to share.
    share_input = (x_init is None) or (x_init is x)
    if out_dtype is None:
        out_dtype = x.dtype

    w_conv = params["w_conv"]          # (Cout, Cin, KH, KW)
    w_init = params["w_init"]
    ksize = w_conv.shape[-1]
    cout = w_conv.shape[0]
    n = x.shape[0]

    # Build patches directly in the compute dtype (halves wrapper HBM traffic).
    patches, hout, wout = _im2col_nchw(x.astype(compute_dtype),
                                       ksize, stride, padding)
    m, k = patches.shape

    sc, bc = _fold_bn(*params["bn_conv"])
    si, bi = _fold_bn(*params["bn_init"])

    def row(v):  # (Cout,) f32 -> (1, Cout) f32 broadcast row
        return v.reshape(1, cout)

    wc = _weight_to_matrix(w_conv).astype(compute_dtype)
    wi = _weight_to_matrix(w_init).astype(compute_dtype)

    # Shared input AND shared weights (PyTorch: mode != 2 clones conv.weight
    # into conv_init) -> the raw conv output is identical -> single matmul.
    single_matmul = share_input and (mode != 2)

    in_bytes = jnp.dtype(compute_dtype).itemsize
    out_bytes = jnp.dtype(out_dtype).itemsize
    n_patch_streams = 1 if share_input else 2
    n_weight_mats = 1 if single_matmul else 2

    budget_bytes, vmem_limit = _vmem_budget_bytes()
    tm = _pick_tile_m(m, k, cout, in_bytes, out_bytes, n_patch_streams,
                      n_weight_mats, resident_bufs=1, budget_bytes=budget_bytes)
    num_tiles = pl.cdiv(m, tm)
    m_pad = num_tiles * tm
    grid = (num_tiles,)

    def prep_patches(p):
        if m_pad != m:
            p = jnp.pad(p, ((0, m_pad - m), (0, 0)))
        return p

    patches = prep_patches(patches)

    out_shape = (jax.ShapeDtypeStruct((m_pad, cout), out_dtype),
                 jax.ShapeDtypeStruct((m_pad, cout), out_dtype))

    cost = pl.CostEstimate(
        flops=2 * n_weight_mats * m_pad * k * cout,
        transcendentals=0,
        bytes_accessed=(n_patch_streams * m_pad * k * in_bytes
                        + n_weight_mats * k * cout * in_bytes
                        + 4 * cout * 4
                        + 2 * m_pad * cout * out_bytes),
    )
    cparams = pltpu.CompilerParams(
        # "parallel" M axis -> v7x megacore shards the >=2 tiles across both TCs.
        dimension_semantics=("parallel",),
        vmem_limit_bytes=vmem_limit,
    )

    if single_matmul:
        kernel = functools.partial(_one_matmul_kernel, mode)
        args = (patches, wc, row(sc), row(bc), row(si), row(bi))
        spec_kinds = ("p", "w", "v", "v", "v", "v")
    elif share_input:
        kernel = functools.partial(_two_matmul_shared_p_kernel, mode)
        args = (patches, wc, wi, row(sc), row(bc), row(si), row(bi))
        spec_kinds = ("p", "w", "w", "v", "v", "v", "v")
    else:
        patches_init, _, _ = _im2col_nchw(x_init.astype(compute_dtype),
                                          ksize, stride, padding)
        patches_init = prep_patches(patches_init)
        kernel = functools.partial(_two_matmul_kernel, mode)
        args = (patches, patches_init, wc, wi, row(sc), row(bc), row(si), row(bi))
        spec_kinds = ("p", "p", "w", "w", "v", "v", "v", "v")

    def run(single_buffer_residents):
        res_kwargs = (dict(pipeline_mode=pl.Buffered(1))
                      if single_buffer_residents else {})
        p_spec = pl.BlockSpec((tm, k), lambda i: (i, 0))
        w_spec = pl.BlockSpec((k, cout), lambda i: (0, 0), **res_kwargs)
        v_spec = pl.BlockSpec((1, cout), lambda i: (0, 0), **res_kwargs)
        o_spec = pl.BlockSpec((tm, cout), lambda i: (i, 0))
        kinds = {"p": p_spec, "w": w_spec, "v": v_spec}
        in_specs = [kinds[s] for s in spec_kinds]
        return pl.pallas_call(
            kernel,
            grid=grid,
            in_specs=in_specs,
            out_specs=(o_spec, o_spec),
            out_shape=out_shape,
            compiler_params=cparams,
            cost_estimate=cost,
        )(*args)

    try:
        # Resident weights / BN rows single-buffered (constant index_map),
        # freeing VMEM for a larger M tile.
        x_flat, xi_flat = run(True)
    except Exception:
        # pipeline_mode=pl.Buffered(1) unsupported on this jax version:
        # fall back to default double-buffering (correctness identical).
        x_flat, xi_flat = run(False)

    def finish(y):
        y = y[:m, :]                              # drop M padding
        y = y.reshape(n, hout, wout, cout)        # NHWC (kernel-native layout)
        if nhwc_output:
            return y
        return jnp.transpose(y, (0, 3, 1, 2))     # NCHW to match the module

    return finish(x_flat), finish(xi_flat)


# ----------------------------------------------------------------------------
# Pure-JAX reference + test harness
# ----------------------------------------------------------------------------

def _reference(x, params, *, mode, stride, padding, x_init=None):
    if x_init is None:
        x_init = x

    def conv(inp, w):
        return jax.lax.conv_general_dilated(
            inp, w, window_strides=(stride, stride),
            padding=[(padding, padding), (padding, padding)],
            dimension_numbers=("NCHW", "OIHW", "NCHW"))

    def bn(y, p):
        gamma, beta, mean, var = p
        scale = gamma / jnp.sqrt(var + 1e-5)
        shift = beta - mean * scale
        return y * scale[None, :, None, None] + shift[None, :, None, None]

    yc = bn(conv(x, params["w_conv"]), params["bn_conv"])
    yi = bn(conv(x_init, params["w_init"]), params["bn_init"])
    if mode == 0:
        return jnp.maximum(yc, 0.0), jnp.maximum(yi, 0.0), yi
    return yc * (yi > 0), jnp.maximum(yi, 0.0), yi


def _check(name, got, want, *, atol, rtol, boundary=None, thresh=0.0):
    ok = jnp.abs(got - want) <= atol + rtol * jnp.abs(want)
    if boundary is not None:
        # Gate decisions near yi == 0 are sensitive to rounding; exclude them.
        ok = ok | (jnp.abs(boundary) < thresh)
    assert bool(jnp.all(ok)), f"{name}: mismatch vs reference"


def _make_params(key, in_channels, out_channels, ksize, mode):
    ks = jax.random.split(key, 8)
    fan_in = in_channels * ksize * ksize
    w_conv = jax.random.normal(ks[0], (out_channels, in_channels, ksize, ksize),
                               jnp.float32) / jnp.sqrt(fan_in)
    if mode != 2:
        w_init = w_conv                     # conv_init.weight = conv.weight.clone()
    else:
        w_init = jax.random.normal(ks[1], (out_channels, in_channels, ksize, ksize),
                                   jnp.float32) / jnp.sqrt(fan_in)

    def bn(k):
        k1, k2, k3, k4 = jax.random.split(k, 4)
        gamma = 1.0 + 0.1 * jax.random.normal(k1, (out_channels,), jnp.float32)
        beta = 0.1 * jax.random.normal(k2, (out_channels,), jnp.float32)
        mean = 0.1 * jax.random.normal(k3, (out_channels,), jnp.float32)
        var = jnp.abs(1.0 + 0.1 * jax.random.normal(k4, (out_channels,), jnp.float32))
        return (gamma, beta, mean, var)

    # Norm layers are fixed (eval-mode) BatchNorm2d, per the "FixBN" contract.
    return {"w_conv": w_conv, "w_init": w_init,
            "bn_conv": bn(ks[2]), "bn_init": bn(ks[3])}


if __name__ == "__main__":
    key = jax.random.PRNGKey(0)
    k_x, k_xi, k_p, k_p2 = jax.random.split(key, 4)

    N, Cin, Cout, H, W, K = 2, 4, 8, 16, 16, 3
    x = jax.random.normal(k_x, (N, Cin, H, W), jnp.float32)

    # mode 1 (gating, shared weights & input) -> single-matmul kernel.
    params1 = _make_params(k_p, Cin, Cout, K, mode=1)
    x1, xi1 = conv_two_stream_norm_fixbn(x, params1, mode=1,
                                         compute_dtype=jnp.float32)
    rx1, rxi1, ryi1 = _reference(x, params1, mode=1, stride=1, padding=1)
    _check("mode1.x", x1, rx1, atol=1e-4, rtol=1e-4, boundary=ryi1, thresh=1e-3)
    _check("mode1.x_init", xi1, rxi1, atol=1e-4, rtol=1e-4)

    # mode 0 (independent ReLUs) -> single-matmul kernel, relu branch.
    x0, xi0 = conv_two_stream_norm_fixbn(x, params1, mode=0,
                                         compute_dtype=jnp.float32)
    rx0, rxi0, _ = _reference(x, params1, mode=0, stride=1, padding=1)
    _check("mode0.x", x0, rx0, atol=1e-4, rtol=1e-4)
    _check("mode0.x_init", xi0, rxi0, atol=1e-4, rtol=1e-4)

    # mode 2 (independent frozen weights) -> two matmuls, shared patch stream.
    params2 = _make_params(k_p2, Cin, Cout, K, mode=2)
    x2, xi2 = conv_two_stream_norm_fixbn(x, params2, mode=2,
                                         compute_dtype=jnp.float32)
    rx2, rxi2, ryi2 = _reference(x, params2, mode=2, stride=1, padding=1)
    _check("mode2.x", x2, rx2, atol=1e-4, rtol=1e-4, boundary=ryi2, thresh=1e-3)
    _check("mode2.x_init", xi2, rxi2, atol=1e-4, rtol=1e-4)

    # Distinct x_init -> two patch streams; exercises bf16 compute + NHWC output.
    x_init = jax.random.normal(k_xi, (N, Cin, H, W), jnp.float32)
    x3, xi3 = conv_two_stream_norm_fixbn(x, params1, mode=1, x_init=x_init,
                                         nhwc_output=True)
    jax.block_until_ready((x3, xi3))
    assert x3.shape == (N, H, W, Cout) and xi3.shape == (N, H, W, Cout)
    assert bool(jnp.all(jnp.isfinite(x3))) and bool(jnp.all(jnp.isfinite(xi3)))

    print("KERNEL_OK")
</pallas_src>

<mosaic_0001>
module attributes {stable_mosaic.version = 11 : i64} {
  func.func @_one_matmul_kernel(%arg0: i32, %arg1: memref<128x36xf32, #tpu.memory_space<vmem>>, %arg2: memref<36x8xf32, #tpu.memory_space<vmem>>, %arg3: memref<1x8xf32, #tpu.memory_space<vmem>>, %arg4: memref<1x8xf32, #tpu.memory_space<vmem>>, %arg5: memref<1x8xf32, #tpu.memory_space<vmem>>, %arg6: memref<1x8xf32, #tpu.memory_space<vmem>>, %arg7: memref<128x8xf32, #tpu.memory_space<vmem>>, %arg8: memref<128x8xf32, #tpu.memory_space<vmem>>) attributes {dimension_semantics = [#tpu.dimension_semantics<parallel>], iteration_bounds = array<i64: 4>, scalar_prefetch = 0 : i64, scratch_operands = 0 : i64, tpu.core_type = #tpu.core_type<tc>, window_params = [{transform_indices = @transform_0, window_bounds = array<i64: 128, 36>}, {pipeline_mode = #tpu.pipeline_mode<synchronous>, transform_indices = @transform_1, window_bounds = array<i64: 36, 8>}, {pipeline_mode = #tpu.pipeline_mode<synchronous>, transform_indices = @transform_2, window_bounds = array<i64: 1, 8>}, {pipeline_mode = #tpu.pipeline_mode<synchronous>, transform_indices = @transform_3, window_bounds = array<i64: 1, 8>}, {pipeline_mode = #tpu.pipeline_mode<synchronous>, transform_indices = @transform_4, window_bounds = array<i64: 1, 8>}, {pipeline_mode = #tpu.pipeline_mode<synchronous>, transform_indices = @transform_5, window_bounds = array<i64: 1, 8>}, {transform_indices = @transform_6, window_bounds = array<i64: 128, 8>}, {transform_indices = @transform_7, window_bounds = array<i64: 128, 8>}]} {
    %c0 = arith.constant 0 : index
    %c0_0 = arith.constant 0 : index
    %0 = vector.load %arg1[%c0, %c0_0] : memref<128x36xf32, #tpu.memory_space<vmem>>, vector<128x36xf32>
    %c0_1 = arith.constant 0 : index
    %c0_2 = arith.constant 0 : index
    %1 = vector.load %arg2[%c0_1, %c0_2] : memref<36x8xf32, #tpu.memory_space<vmem>>, vector<36x8xf32>
    %cst = arith.constant dense<0.000000e+00> : vector<128x8xf32>
    %2 = tpu.matmul %0, %1, %cst {dimension_numbers = #tpu.dot_dimension_numbers<[1], [0], [0], [1], [0, 0, 1, 1], [], []>} : vector<128x36xf32>, vector<36x8xf32>, vector<128x8xf32> -> vector<128x8xf32>
    %c0_3 = arith.constant 0 : index
    %c0_4 = arith.constant 0 : index
    %3 = vector.load %arg3[%c0_3, %c0_4] : memref<1x8xf32, #tpu.memory_space<vmem>>, vector<1x8xf32>
    %4 = vector.broadcast %3 : vector<1x8xf32> to vector<128x8xf32>
    %5 = arith.mulf %2, %4 : vector<128x8xf32>
    %c0_5 = arith.constant 0 : index
    %c0_6 = arith.constant 0 : index
    %6 = vector.load %arg4[%c0_5, %c0_6] : memref<1x8xf32, #tpu.memory_space<vmem>>, vector<1x8xf32>
    %7 = vector.broadcast %6 : vector<1x8xf32> to vector<128x8xf32>
    %8 = arith.addf %5, %7 : vector<128x8xf32>
    %c0_7 = arith.constant 0 : index
    %c0_8 = arith.constant 0 : index
    %9 = vector.load %arg5[%c0_7, %c0_8] : memref<1x8xf32, #tpu.memory_space<vmem>>, vector<1x8xf32>
    %10 = vector.broadcast %9 : vector<1x8xf32> to vector<128x8xf32>
    %11 = arith.mulf %2, %10 : vector<128x8xf32>
    %c0_9 = arith.constant 0 : index
    %c0_10 = arith.constant 0 : index
    %12 = vector.load %arg6[%c0_9, %c0_10] : memref<1x8xf32, #tpu.memory_space<vmem>>, vector<1x8xf32>
    %13 = vector.broadcast %12 : vector<1x8xf32> to vector<128x8xf32>
    %14 = arith.addf %11, %13 : vector<128x8xf32>
    %cst_11 = arith.constant 0.000000e+00 : f32
    %15 = vector.broadcast %cst_11 : f32 to vector<128x8xf32>
    %16 = arith.cmpf ogt, %14, %15 : vector<128x8xf32>
    %cst_12 = arith.constant 0.000000e+00 : f32
    %17 = vector.broadcast %cst_12 : f32 to vector<128x8xf32>
    %18 = arith.select %16, %8, %17 : vector<128x8xi1>, vector<128x8xf32>
    %c0_13 = arith.constant 0 : index
    %c0_14 = arith.constant 0 : index
    %19 = vector.load %arg7[%c0_13, %c0_14] : memref<128x8xf32, #tpu.memory_space<vmem>>, vector<128x8xf32>
    tpu.vector_store %arg7[%c0_13, %c0_14], %18 {strides = array<i32>} : memref<128x8xf32, #tpu.memory_space<vmem>>, vector<128x8xf32>,
    %cst_15 = arith.constant 0.000000e+00 : f32
    %20 = vector.broadcast %cst_15 : f32 to vector<128x8xf32>
    %21 = arith.maximumf %14, %20 : vector<128x8xf32>
    %c0_16 = arith.constant 0 : index
    %c0_17 = arith.constant 0 : index
    %22 = vector.load %arg8[%c0_16, %c0_17] : memref<128x8xf32, #tpu.memory_space<vmem>>, vector<128x8xf32>
    tpu.vector_store %arg8[%c0_16, %c0_17], %21 {strides = array<i32>} : memref<128x8xf32, #tpu.memory_space<vmem>>, vector<128x8xf32>,
    return
  }
  func.func @transform_0(%arg0: i32) -> (i32, i32) {
    %c0_i32 = arith.constant 0 : i32
    %c0_i32_0 = arith.constant 0 : i32
    return %arg0, %c0_i32 : i32, i32
  }
  func.func @transform_1(%arg0: i32) -> (i32, i32) {
    %c0_i32 = arith.constant 0 : i32
    %c0_i32_0 = arith.constant 0 : i32
    %c0_i32_1 = arith.constant 0 : i32
    return %c0_i32, %c0_i32_0 : i32, i32
  }
  func.func @transform_2(%arg0: i32) -> (i32, i32) {
    %c0_i32 = arith.constant 0 : i32
    %c0_i32_0 = arith.constant 0 : i32
    %c0_i32_1 = arith.constant 0 : i32
    return %c0_i32, %c0_i32_0 : i32, i32
  }
  func.func @transform_3(%arg0: i32) -> (i32, i32) {
    %c0_i32 = arith.constant 0 : i32
    %c0_i32_0 = arith.constant 0 : i32
    %c0_i32_1 = arith.constant 0 : i32
    return %c0_i32, %c0_i32_0 : i32, i32
  }
  func.func @transform_4(%arg0: i32) -> (i32, i32) {
    %c0_i32 = arith.constant 0 : i32
    %c0_i32_0 = arith.constant 0 : i32
    %c0_i32_1 = arith.constant 0 : i32
    return %c0_i32, %c0_i32_0 : i32, i32
  }
  func.func @transform_5(%arg0: i32) -> (i32, i32) {
    %c0_i32 = arith.constant 0 : i32
    %c0_i32_0 = arith.constant 0 : i32
    %c0_i32_1 = arith.constant 0 : i32
    return %c0_i32, %c0_i32_0 : i32, i32
  }
  func.func @transform_6(%arg0: i32) -> (i32, i32) {
    %c0_i32 = arith.constant 0 : i32
    %c0_i32_0 = arith.constant 0 : i32
    return %arg0, %c0_i32 : i32, i32
  }
  func.func @transform_7(%arg0: i32) -> (i32, i32) {
    %c0_i32 = arith.constant 0 : i32
    %c0_i32_0 = arith.constant 0 : i32
    return %arg0, %c0_i32 : i32, i32
  }
}

module attributes {stable_mosaic.version = 11 : i64} {
  func.func @_one_matmul_kernel(%arg0: i32, %arg1: memref<128x36xf32, #tpu.memory_space<vmem>>, %arg2: memref<36x8xf32, #tpu.memory_space<vmem>>, %arg3: memref<1x8xf32, #tpu.memory_space<vmem>>, %arg4: memref<1x8xf32, #tpu.memory_space<vmem>>, %arg5: memref<1x8xf32, #tpu.memory_space<vmem>>, %arg6: memref<1x8xf32, #tpu.memory_space<vmem>>, %arg7: memref<128x8xf32, #tpu.memory_space<vmem>>, %arg8: memref<128x8xf32, #tpu.memory_space<vmem>>) attributes {dimension_semantics = [#tpu.dimension_semantics<parallel>], iteration_bounds = array<i64: 4>, scalar_prefetch = 0 : i64, scratch_operands = 0 : i64, tpu.core_type = #tpu.core_type<tc>, window_params = [{transform_indices = @transform_0, window_bounds = array<i64: 128, 36>}, {pipeline_mode = #tpu.pipeline_mode<synchronous>, transform_indices = @transform_1, window_bounds = array<i64: 36, 8>}, {pipeline_mode = #tpu.pipeline_mode<synchronous>, transform_indices = @transform_2, window_bounds = array<i64: 1, 8>}, {pipeline_mode = #tpu.pipeline_mode<synchronous>, transform_indices = @transform_3, window_bounds = array<i64: 1, 8>}, {pipeline_mode = #tpu.pipeline_mode<synchronous>, transform_indices = @transform_4, window_bounds = array<i64: 1, 8>}, {pipeline_mode = #tpu.pipeline_mode<synchronous>, transform_indices = @transform_5, window_bounds = array<i64: 1, 8>}, {transform_indices = @transform_6, window_bounds = array<i64: 128, 8>}, {transform_indices = @transform_7, window_bounds = array<i64: 128, 8>}]} {
    %c0 = arith.constant 0 : index
    %c0_0 = arith.constant 0 : index
    %0 = vector.load %arg1[%c0, %c0_0] : memref<128x36xf32, #tpu.memory_space<vmem>>, vector<128x36xf32>
    %c0_1 = arith.constant 0 : index
    %c0_2 = arith.constant 0 : index
    %1 = vector.load %arg2[%c0_1, %c0_2] : memref<36x8xf32, #tpu.memory_space<vmem>>, vector<36x8xf32>
    %cst = arith.constant dense<0.000000e+00> : vector<128x8xf32>
    %2 = tpu.matmul %0, %1, %cst {dimension_numbers = #tpu.dot_dimension_numbers<[1], [0], [0], [1], [0, 0, 1, 1], [], []>} : vector<128x36xf32>, vector<36x8xf32>, vector<128x8xf32> -> vector<128x8xf32>
    %c0_3 = arith.constant 0 : index
    %c0_4 = arith.constant 0 : index
    %3 = vector.load %arg3[%c0_3, %c0_4] : memref<1x8xf32, #tpu.memory_space<vmem>>, vector<1x8xf32>
    %4 = vector.broadcast %3 : vector<1x8xf32> to vector<128x8xf32>
    %5 = arith.mulf %2, %4 : vector<128x8xf32>
    %c0_5 = arith.constant 0 : index
    %c0_6 = arith.constant 0 : index
    %6 = vector.load %arg4[%c0_5, %c0_6] : memref<1x8xf32, #tpu.memory_space<vmem>>, vector<1x8xf32>
    %7 = vector.broadcast %6 : vector<1x8xf32> to vector<128x8xf32>
    %8 = arith.addf %5, %7 : vector<128x8xf32>
    %c0_7 = arith.constant 0 : index
    %c0_8 = arith.constant 0 : index
    %9 = vector.load %arg5[%c0_7, %c0_8] : memref<1x8xf32, #tpu.memory_space<vmem>>, vector<1x8xf32>
    %10 = vector.broadcast %9 : vector<1x8xf32> to vector<128x8xf32>
    %11 = arith.mulf %2, %10 : vector<128x8xf32>
    %c0_9 = arith.constant 0 : index
    %c0_10 = arith.constant 0 : index
    %12 = vector.load %arg6[%c0_9, %c0_10] : memref<1x8xf32, #tpu.memory_space<vmem>>, vector<1x8xf32>
    %13 = vector.broadcast %12 : vector<1x8xf32> to vector<128x8xf32>
    %14 = arith.addf %11, %13 : vector<128x8xf32>
    %cst_11 = arith.constant 0.000000e+00 : f32
    %15 = vector.broadcast %cst_11 : f32 to vector<128x8xf32>
    %16 = arith.cmpf ogt, %14, %15 : vector<128x8xf32>
    %cst_12 = arith.constant 0.000000e+00 : f32
    %17 = vector.broadcast %cst_12 : f32 to vector<128x8xf32>
    %18 = arith.select %16, %8, %17 : vector<128x8xi1>, vector<128x8xf32>
    %c0_13 = arith.constant 0 : index
    %c0_14 = arith.constant 0 : index
    %19 = vector.load %arg7[%c0_13, %c0_14] : memref<128x8xf32, #tpu.memory_space<vmem>>, vector<128x8xf32>
    tpu.vector_store %arg7[%c0_13, %c0_14], %18 {strides = array<i32>} : memref<128x8xf32, #tpu.memory_space<vmem>>, vector<128x8xf32>,
    %cst_15 = arith.constant 0.000000e+00 : f32
    %20 = vector.broadcast %cst_15 : f32 to vector<128x8xf32>
    %21 = arith.maximumf %14, %20 : vector<128x8xf32>
    %c0_16 = arith.constant 0 : index
    %c0_17 = arith.constant 0 : index
    %22 = vector.load %arg8[%c0_16, %c0_17] : memref<128x8xf32, #tpu.memory_space<vmem>>, vector<128x8xf32>
    tpu.vector_store %arg8[%c0_16, %c0_17], %21 {strides = array<i32>} : memref<128x8xf32, #tpu.memory_space<vmem>>, vector<128x8xf32>,
    return
  }
  func.func @transform_0(%arg0: i32) -> (i32, i32) {
    %c0_i32 = arith.constant 0 : i32
    %c0_i32_0 = arith.constant 0 : i32
    return %arg0, %c0_i32 : i32, i32
  }
  func.func @transform_1(%arg0: i32) -> (i32, i32) {
    %c0_i32 = arith.constant 0 : i32
    %c0_i32_0 = arith.constant 0 : i32
    %c0_i32_1 = arith.constant 0 : i32
    return %c0_i32, %c0_i32_0 : i32, i32
  }
  func.func @transform_2(%arg0: i32) -> (i32, i32) {
    %c0_i32 = arith.constant 0 : i32
    %c0_i32_0 = arith.constant 0 : i32
    %c0_i32_1 = arith.constant 0 : i32
    return %c0_i32, %c0_i32_0 : i32, i32
  }
  func.func @transform_3(%arg0: i32) -> (i32, i32) {
    %c0_i32 = arith.constant 0 : i32
    %c0_i32_0 = arith.constant 0 : i32
    %c0_i32_1 = arith.constant 0 : i32
    return %c0_i32, %c0_i32_0 : i32, i32
  }
  func.func @transform_4(%arg0: i32) -> (i32, i32) {
    %c0_i32 = arith.constant 0 : i32
    %c0_i32_0 = arith.constant 0 : i32
    %c0_i32_1 = arith.constant 0 : i32
    return %c0_i32, %c0_i32_0 : i32, i32
  }
  func.func @transform_5(%arg0: i32) -> (i32, i32) {
    %c0_i32 = arith.constant 0 : i32
    %c0_i32_0 = arith.constant 0 : i32
    %c0_i32_1 = arith.constant 0 : i32
    return %c0_i32, %c0_i32_0 : i32, i32
  }
  func.func @transform_6(%arg0: i32) -> (i32, i32) {
    %c0_i32 = arith.constant 0 : i32
    %c0_i32_0 = arith.constant 0 : i32
    return %arg0, %c0_i32 : i32, i32
  }
  func.func @transform_7(%arg0: i32) -> (i32, i32) {
    %c0_i32 = arith.constant 0 : i32
    %c0_i32_0 = arith.constant 0 : i32
    return %arg0, %c0_i32 : i32, i32
  }
}

</mosaic_0001>

<llo_original>
// kernel: tpu_custom_call.1
$region0: #{tpu_custom_call.1}
  #allocation0 [shape = 'u32[]', space=smem, size = 0x4, offset = 0x4, fixed_abs, tag = 'smem constant byte address 0x4 - core index']
  #allocation1 [shape = 'u32[144,128]{1,0:T(1,128)}', space=vmem, size = 0x12000, scoped, tag = 'internal scratch']
  %s0 = inlined_call_operand.vmem [shape: f32[512,36], index: 0, kind: input, shape index: {}]
  %s1 = inlined_call_operand.vmem [shape: f32[36,8], index: 1, kind: input, shape index: {}]
  %s2 = inlined_call_operand.vmem [shape: f32[1,8], index: 2, kind: input, shape index: {}]
  %s3 = inlined_call_operand.vmem [shape: f32[1,8], index: 3, kind: input, shape index: {}]
  %s4 = inlined_call_operand.vmem [shape: f32[1,8], index: 4, kind: input, shape index: {}]
  %s5 = inlined_call_operand.vmem [shape: f32[1,8], index: 5, kind: input, shape index: {}]
  %s6 = inlined_call_operand.vmem [shape: f32[512,8], index: 6, kind: output, shape index: {0}]
  %s7 = inlined_call_operand.vmem [shape: f32[512,8], index: 7, kind: output, shape index: {1}]
  %8 = xla_tuple %s6, %s7
  %s9 = sld [smem:[#allocation0]]
  $region65: #{tpu_custom_call.1} parent=0
    _
  %s11 = ssub.s32 1, %s9
  %s12 = scalar_select 0, %s11, %s9
  loop: start=0, step=1, limit=6
  $region2: #{tpu_custom_call.1} parent=0 // loop_pre_header
    _
  $region3: #{tpu_custom_call.1} parent=0 // loop_header
    %s14 = sphi 0, %s18
    %p15 = scmp.ge.s32.totalorder %s14, 6
    %s24 = sphi 0, %s26
    %s27 = sphi 0, %s24
    %s28 = sphi 0, %s27
    %s44 = sphi 0, %s28
    %s48 = sphi 0, %s48
    %s50 = sphi 0, %s48
    %s51 = sphi 0, %s50
    %s65 = sphi 0, %s51
    %s69 = sphi 0, %s69
    %s71 = sphi 0, %s69
    %s72 = sphi 0, %s71
    %s86 = sphi 0, %s72
    %s90 = sphi 0, %s90
    %s92 = sphi 0, %s90
    %s93 = sphi 0, %s92
    %s107 = sphi 0, %s93
    %s111 = sphi 0, %s111
    %s113 = sphi 0, %s111
    %s114 = sphi 0, %s113
    %s128 = sphi 0, %s114
    %s132 = sphi 0, %s132
    %s134 = sphi 0, %s132
    %s135 = sphi 0, %s134
    %s149 = sphi 0, %s135
    %s155 = sphi 0, %s157
    %s158 = sphi 0, %s155
    %s159 = sphi 0, %s158
    %s175 = sphi 0, %s159
    %s181 = sphi 0, %s183
    %s184 = sphi 0, %s181
    %s185 = sphi 0, %s184
    %s201 = sphi 0, %s185
  $region4: #{tpu_custom_call.1} parent=0 // loop_header_branch
    %17 = sbr.rel (%p15) target = $region8
  $region5: #{tpu_custom_call.1} parent=0 // loop_body
    %s19 = ssub.s32 %s14, 1
    %s20 = ssub.s32 %s14, 2
    %s21 = sadd.s32 %s14, 1
    %s22 = ssub.s32 %s14, %s21
    %p23 = scmp.eq.s32.totalorder %s22, 0
    %s25 = sadd.s32 %s24, 1
    %s26 = scalar_select %p23, %s24, %s25
    %p29 = pneg %p23
    %p30 = scmp.eq.s32.totalorder %s14, 3
    %p31 = por %p29, %p30
    %p32 = scmp.ne.s32.totalorder %s24, %s27
    %p33 = scmp.eq.s32.totalorder %s14, 0
    %p34 = por %p32, %p33
    %p35 = scmp.ne.s32.totalorder %s24, %s27
    %p36 = scmp.eq.s32.totalorder %s19, 3
    %p37 = por %p35, %p36
    %p38 = scmp.ne.s32.totalorder %s27, %s28
    %p39 = scmp.eq.s32.totalorder %s19, 0
    %p40 = por %p38, %p39
    %p41 = scmp.ne.s32.totalorder %s27, %s28
    %p42 = scmp.eq.s32.totalorder %s20, 3
    %p43 = por %p41, %p42
    %p45 = scmp.ne.s32.totalorder %s28, %s44
    %p46 = scmp.eq.s32.totalorder %s20, 0
    %p47 = por %p45, %p46
    %s49 = sadd.s32 %s48, 1
    %p52 = scmp.eq.s32.totalorder %s14, 3
    %p53 = scmp.ne.s32.totalorder %s48, %s50
    %p54 = scmp.eq.s32.totalorder %s14, 0
    %p55 = por %p53, %p54
    %p56 = scmp.ne.s32.totalorder %s48, %s50
    %p57 = scmp.eq.s32.totalorder %s19, 3
    %p58 = por %p56, %p57
    %p59 = scmp.ne.s32.totalorder %s50, %s51
    %p60 = scmp.eq.s32.totalorder %s19, 0
    %p61 = por %p59, %p60
    %p62 = scmp.ne.s32.totalorder %s50, %s51
    %p63 = scmp.eq.s32.totalorder %s20, 3
    %p64 = por %p62, %p63
    %p66 = scmp.ne.s32.totalorder %s51, %s65
    %p67 = scmp.eq.s32.totalorder %s20, 0
    %p68 = por %p66, %p67
    %s70 = sadd.s32 %s69, 1
    %p73 = scmp.eq.s32.totalorder %s14, 3
    %p74 = scmp.ne.s32.totalorder %s69, %s71
    %p75 = scmp.eq.s32.totalorder %s14, 0
    %p76 = por %p74, %p75
    %p77 = scmp.ne.s32.totalorder %s69, %s71
    %p78 = scmp.eq.s32.totalorder %s19, 3
    %p79 = por %p77, %p78
    %p80 = scmp.ne.s32.totalorder %s71, %s72
    %p81 = scmp.eq.s32.totalorder %s19, 0
    %p82 = por %p80, %p81
    %p83 = scmp.ne.s32.totalorder %s71, %s72
    %p84 = scmp.eq.s32.totalorder %s20, 3
    %p85 = por %p83, %p84
    %p87 = scmp.ne.s32.totalorder %s72, %s86
    %p88 = scmp.eq.s32.totalorder %s20, 0
    %p89 = por %p87, %p88
    %s91 = sadd.s32 %s90, 1
    %p94 = scmp.eq.s32.totalorder %s14, 3
    %p95 = scmp.ne.s32.totalorder %s90, %s92
    %p96 = scmp.eq.s32.totalorder %s14, 0
    %p97 = por %p95, %p96
    %p98 = scmp.ne.s32.totalorder %s90, %s92
    %p99 = scmp.eq.s32.totalorder %s19, 3
    %p100 = por %p98, %p99
    %p101 = scmp.ne.s32.totalorder %s92, %s93
    %p102 = scmp.eq.s32.totalorder %s19, 0
    %p103 = por %p101, %p102
    %p104 = scmp.ne.s32.totalorder %s92, %s93
    %p105 = scmp.eq.s32.totalorder %s20, 3
    %p106 = por %p104, %p105
    %p108 = scmp.ne.s32.totalorder %s93, %s107
    %p109 = scmp.eq.s32.totalorder %s20, 0
    %p110 = por %p108, %p109
    %s112 = sadd.s32 %s111, 1
    %p115 = scmp.eq.s32.totalorder %s14, 3
    %p116 = scmp.ne.s32.totalorder %s111, %s113
    %p117 = scmp.eq.s32.totalorder %s14, 0
    %p118 = por %p116, %p117
    %p119 = scmp.ne.s32.totalorder %s111, %s113
    %p120 = scmp.eq.s32.totalorder %s19, 3
    %p121 = por %p119, %p120
    %p122 = scmp.ne.s32.totalorder %s113, %s114
    %p123 = scmp.eq.s32.totalorder %s19, 0
    %p124 = por %p122, %p123
    %p125 = scmp.ne.s32.totalorder %s113, %s114
    %p126 = scmp.eq.s32.totalorder %s20, 3
    %p127 = por %p125, %p126
    %p129 = scmp.ne.s32.totalorder %s114, %s128
    %p130 = scmp.eq.s32.totalorder %s20, 0
    %p131 = por %p129, %p130
    %s133 = sadd.s32 %s132, 1
    %p136 = scmp.eq.s32.totalorder %s14, 3
    %p137 = scmp.ne.s32.totalorder %s132, %s134
    %p138 = scmp.eq.s32.totalorder %s14, 0
    %p139 = por %p137, %p138
    %p140 = scmp.ne.s32.totalorder %s132, %s134
    %p141 = scmp.eq.s32.totalorder %s19, 3
    %p142 = por %p140, %p141
    %p143 = scmp.ne.s32.totalorder %s134, %s135
    %p144 = scmp.eq.s32.totalorder %s19, 0
    %p145 = por %p143, %p144
    %p146 = scmp.ne.s32.totalorder %s134, %s135
    %p147 = scmp.eq.s32.totalorder %s20, 3
    %p148 = por %p146, %p147
    %p150 = scmp.ne.s32.totalorder %s135, %s149
    %p151 = scmp.eq.s32.totalorder %s20, 0
    %p152 = por %p150, %p151
    %s153 = ssub.s32 %s14, %s21
    %p154 = scmp.eq.s32.totalorder %s153, 0
    %s156 = sadd.s32 %s155, 1
    %s157 = scalar_select %p154, %s155, %s156
    %p160 = pneg %p154
    %p161 = scmp.eq.s32.totalorder %s14, 3
    %p162 = por %p160, %p161
    %p163 = scmp.ne.s32.totalorder %s155, %s158
    %p164 = scmp.eq.s32.totalorder %s14, 0
    %p165 = por %p163, %p164
    %p166 = scmp.ne.s32.totalorder %s155, %s158
    %p167 = scmp.eq.s32.totalorder %s19, 3
    %p168 = por %p166, %p167
    %p169 = scmp.ne.s32.totalorder %s158, %s159
    %p170 = scmp.eq.s32.totalorder %s19, 0
    %p171 = por %p169, %p170
    %p172 = scmp.ne.s32.totalorder %s158, %s159
    %p173 = scmp.eq.s32.totalorder %s20, 3
    %p174 = por %p172, %p173
    %p176 = scmp.ne.s32.totalorder %s159, %s175
    %p177 = scmp.eq.s32.totalorder %s20, 0
    %p178 = por %p176, %p177
    %s179 = ssub.s32 %s14, %s21
    %p180 = scmp.eq.s32.totalorder %s179, 0
    %s182 = sadd.s32 %s181, 1
    %s183 = scalar_select %p180, %s181, %s182
    %p186 = pneg %p180
    %p187 = scmp.eq.s32.totalorder %s14, 3
    %p188 = por %p186, %p187
    %p189 = scmp.ne.s32.totalorder %s181, %s184
    %p190 = scmp.eq.s32.totalorder %s14, 0
    %p191 = por %p189, %p190
    %p192 = scmp.ne.s32.totalorder %s181, %s184
    %p193 = scmp.eq.s32.totalorder %s19, 3
    %p194 = por %p192, %p193
    %p195 = scmp.ne.s32.totalorder %s184, %s185
    %p196 = scmp.eq.s32.totalorder %s19, 0
    %p197 = por %p195, %p196
    %p198 = scmp.ne.s32.totalorder %s184, %s185
    %p199 = scmp.eq.s32.totalorder %s20, 3
    %p200 = por %p198, %p199
    %p202 = scmp.ne.s32.totalorder %s185, %s201
    %p203 = scmp.eq.s32.totalorder %s20, 0
    %p204 = por %p202, %p203
    %p205 = scmp.le.s32.totalorder 1, %s14
    %p206 = scmp.lt.s32.totalorder %s14, 5
    %p207 = pnand %p205, %p206
    %p208 = pneg %p207
    // Predicated region
    $region9: #{tpu_custom_call.1} parent=5 // pred_check
      _
    $region10: #{tpu_custom_call.1} parent=5 // pred_check_branch
      %210 = sbr.rel (%p207) target = $region12
    $region11: #{tpu_custom_call.1} parent=5 // pred_region
      %s211 = ssub.s32 %s14, 1
      // Predicated region
      $region13: #{tpu_custom_call.1} parent=11 // pred_check
        %p212 = pneg %p61
      $region14: #{tpu_custom_call.1} parent=11 // pred_check_branch
        %214 = sbr.rel (%p212) target = $region16
      $region15: #{tpu_custom_call.1} parent=11 // pred_region
        _
      $region16: #{tpu_custom_call.1} parent=11 // pred_fallthru
        _
      // Predicated region
      $region17: #{tpu_custom_call.1} parent=11 // pred_check
        %p215 = pneg %p82
      $region18: #{tpu_custom_call.1} parent=11 // pred_check_branch
        %217 = sbr.rel (%p215) target = $region20
      $region19: #{tpu_custom_call.1} parent=11 // pred_region
        _
      $region20: #{tpu_custom_call.1} parent=11 // pred_fallthru
        _
      // Predicated region
      $region21: #{tpu_custom_call.1} parent=11 // pred_check
        %p218 = pneg %p103
      $region22: #{tpu_custom_call.1} parent=11 // pred_check_branch
        %220 = sbr.rel (%p218) target = $region24
      $region23: #{tpu_custom_call.1} parent=11 // pred_region
        _
      $region24: #{tpu_custom_call.1} parent=11 // pred_fallthru
        _
      // Predicated region
      $region25: #{tpu_custom_call.1} parent=11 // pred_check
        %p221 = pneg %p124
      $region26: #{tpu_custom_call.1} parent=11 // pred_check_branch
        %223 = sbr.rel (%p221) target = $region28
      $region27: #{tpu_custom_call.1} parent=11 // pred_region
        _
      $region28: #{tpu_custom_call.1} parent=11 // pred_fallthru
        _
      // Predicated region
      $region29: #{tpu_custom_call.1} parent=11 // pred_check
        %p224 = pneg %p145
      $region30: #{tpu_custom_call.1} parent=11 // pred_check_branch
        %226 = sbr.rel (%p224) target = $region32
      $region31: #{tpu_custom_call.1} parent=11 // pred_region
        _
      $region32: #{tpu_custom_call.1} parent=11 // pred_fallthru
        _
    $region12: #{tpu_custom_call.1} parent=5 // pred_fallthru
      _
    %p227 = scmp.lt.s32.totalorder %s14, 4
    // Predicated region
    $region33: #{tpu_custom_call.1} parent=5 // pred_check
      %p228 = pneg %p227
    $region34: #{tpu_custom_call.1} parent=5 // pred_check_branch
      %230 = sbr.rel (%p228) target = $region36
    $region35: #{tpu_custom_call.1} parent=5 // pred_region
      // Predicated region
      $region37: #{tpu_custom_call.1} parent=35 // pred_check
        %p231 = pneg %p34
      $region38: #{tpu_custom_call.1} parent=35 // pred_check_branch
        %233 = sbr.rel (%p231) target = $region40
      $region39: #{tpu_custom_call.1} parent=35 // pred_region
        %s234 = smul.u32 16, %s14
        %p235 = scmp.lt.s32.totalorder %s234, 63
        %s236 = scalar_select %p235, %s234, 63
        %s237 = smul.addr %s236, 8
        %s238 = scalar_lea.vmem %s0, %s237
        %s239 = smul.u32 16, %s14
      $region40: #{tpu_custom_call.1} parent=35 // pred_fallthru
        _
    $region36: #{tpu_custom_call.1} parent=5 // pred_fallthru
      _
    %p240 = scmp.le.s32.totalorder 1, %s14
    %p241 = scmp.lt.s32.totalorder %s14, 5
    %p242 = pnand %p240, %p241
    %p243 = pneg %p242
    // Predicated region
    $region41: #{tpu_custom_call.1} parent=5 // pred_check
      _
    $region42: #{tpu_custom_call.1} parent=5 // pred_check_branch
      %245 = sbr.rel (%p242) target = $region44
    $region43: #{tpu_custom_call.1} parent=5 // pred_region
      %s246 = ssub.s32 %s14, 1
      %s247 = smul.u32 16, %s19
      %p248 = scmp.lt.s32.totalorder %s247, 63
      %s249 = scalar_select %p248, %s247, 63
      %s250 = smul.addr %s249, 8
      %s251 = scalar_lea.vmem %s0, %s250
      %p252 = pneg %p40
      %p253 = pneg %p37
      %p254 = pneg %p61
      %p255 = pneg %p58
      %p256 = pneg %p82
      %p257 = pneg %p79
      %p258 = pneg %p103
      %p259 = pneg %p100
      %p260 = pneg %p124
      %p261 = pneg %p121
      %p262 = pneg %p145
      %p263 = pneg %p142
      %p264 = pneg %p171
      %p265 = pneg %p168
      %s266 = smul.u32 16, %s19
      %p267 = scmp.lt.s32.totalorder %s266, 63
      %s268 = scalar_select %p267, %s266, 63
      %s269 = smul.addr %s268, 8
      %s270 = scalar_lea.vmem %s6, %s269
      %p271 = pneg %p197
      %p272 = pneg %p194
      %s273 = smul.u32 16, %s19
      %p274 = scmp.lt.s32.totalorder %s273, 63
      %s275 = scalar_select %p274, %s273, 63
      %s276 = smul.addr %s275, 8
      %s277 = scalar_lea.vmem %s7, %s276
      %s278 = smul.u32 16, %s19
      %p279 = scmp.lt.s32.totalorder %s278, 63
      %s280 = scalar_select %p279, %s278, 63
      %s281 = smul.addr %s280, 8
      %s282 = scalar_lea.vmem %s0, %s281
      %s283 = smul.u32 16, %s19
      %s284 = smul.u32 16, %s19
      %p285 = scmp.lt.s32.totalorder %s284, 63
      %s286 = scalar_select %p285, %s284, 63
      %s287 = smul.addr %s286, 8
      %s288 = scalar_lea.vmem %s6, %s287
      %s289 = smul.u32 16, %s19
      %s290 = smul.u32 16, %s19
      %p291 = scmp.lt.s32.totalorder %s290, 63
      %s292 = scalar_select %p291, %s290, 63
      %s293 = smul.addr %s292, 8
      %s294 = scalar_lea.vmem %s7, %s293
      %s295 = smul.u32 16, %s19
      %v296 = vld [vmem:[%s282] sm:$0xff]
      %v297 = vld [vmem:[%s282 + $0x8] sm:$0xff]
      %v298 = vld [vmem:[%s282 + $0x10] sm:$0xff]
      %v299 = vld [vmem:[%s282 + $0x18] sm:$0xff]
      %v300 = vld [vmem:[%s282 + $0x20] sm:$0xff]
      %v301 = vld [vmem:[%s282 + $0x28] sm:$0xff]
      %v302 = vld [vmem:[%s282 + $0x30] sm:$0xff]
      %v303 = vld [vmem:[%s282 + $0x38] sm:$0xff]
      %v304 = vld [vmem:[%s282 + $0x40] sm:$0xff]
      %v305 = vld [vmem:[%s282 + $0x48] sm:$0xff]
      %v306 = vld [vmem:[%s282 + $0x50] sm:$0xff]
      %v307 = vld [vmem:[%s282 + $0x58] sm:$0xff]
      %v308 = vld [vmem:[%s282 + $0x60] sm:$0xff]
      %v309 = vld [vmem:[%s282 + $0x68] sm:$0xff]
      %v310 = vld [vmem:[%s282 + $0x70] sm:$0xff]
      %v311 = vld [vmem:[%s282 + $0x78] sm:$0xff]
      %v312 = vld [vmem:[%s1] sm:$0xff]
      %v313 = vld [vmem:[%s1 + $0x8] sm:$0xff]
      %v314 = vld [vmem:[%s1 + $0x10] sm:$0xff]
      %v315 = vld [vmem:[%s1 + $0x18] sm:$0xff]
      %v316 = vld [vmem:[%s1 + $0x20] sm:$0xf]
      %vm317 = vcmask 293888
      %v319 = vsel %vm317, %v296, 0
      %v322 = vsel %vm317, %v297, 0
      %v325 = vsel %vm317, %v298, 0
      %v328 = vsel %vm317, %v299, 0
      %v331 = vsel %vm317, %v300, 0
      %v334 = vsel %vm317, %v301, 0
      %v337 = vsel %vm317, %v302, 0
      %v340 = vsel %vm317, %v303, 0
      %v343 = vsel %vm317, %v304, 0
      %v346 = vsel %vm317, %v305, 0
      %v349 = vsel %vm317, %v306, 0
      %v352 = vsel %vm317, %v307, 0
      %v355 = vsel %vm317, %v308, 0
      %v358 = vsel %vm317, %v309, 0
      %v361 = vsel %vm317, %v310, 0
      %v364 = vsel %vm317, %v311, 0
      %vm366 = vcmask 1043456
      %v368 = vsel %vm366, %v316, 0
      %370 = vmatprep.subr.mxu0 0.0
      %371 = vmatpush1.msra.mxu0 0.0
      %372 = vmatprep.subr.mxu0 0.0
      %373 = vmatpush1.msra.mxu0 0.0
      %374 = vmatprep.subr.mxu0 0.0
      %375 = vmatpush1.msra.mxu0 0.0
      %376 = vmatprep.subr.mxu0 0.0
      %377 = vmatpush1.msra.mxu0 0.0
      %378 = vmatprep.subr.mxu0 0.0
      %379 = vmatpush1.msra.mxu0 0.0
      %380 = vmatprep.subr.mxu0 0.0
      %381 = vmatpush1.msra.mxu0 0.0
      %382 = vmatprep.subr.mxu0 0.0
      %383 = vmatpush1.msra.mxu0 0.0
      %384 = vmatprep.subr.mxu0 0.0
      %385 = vmatpush1.msra.mxu0 0.0
      %386 = vmatprep.subr.mxu0 0.0
      %387 = vmatpush1.msra.mxu0 0.0
      %388 = vmatprep.subr.mxu0 0.0
      %389 = vmatpush1.msra.mxu0 0.0
      %390 = vmatprep.subr.mxu0 0.0
      %391 = vmatpush1.msra.mxu0 0.0
      %392 = vmatprep.subr.mxu0 0.0
      %393 = vmatpush1.msra.mxu0 %v368
      %394 = vmatprep.subr.mxu0 0.0
      %395 = vmatpush1.msra.mxu0 %v315
      %396 = vmatprep.subr.mxu0 0.0
      %397 = vmatpush1.msra.mxu0 %v314
      %398 = vmatprep.subr.mxu0 0.0
      %399 = vmatpush1.msra.mxu0 %v313
      %400 = vmatprep.subr.mxu0 0.0
      %401 = vmatpush1.msra.mxu0 %v312
      %402 = vmatprep.subr.mxu0 0.0
      %403 = vmatpush2.msra.mxu0 0.0
      %404 = vmatprep.subr.mxu0 0.0
      %405 = vmatpush2.msra.mxu0 0.0
      %406 = vmatprep.subr.mxu0 0.0
      %407 = vmatpush2.msra.mxu0 0.0
      %408 = vmatprep.subr.mxu0 0.0
      %409 = vmatpush2.msra.mxu0 0.0
      %410 = vmatprep.subr.mxu0 0.0
      %411 = vmatpush2.msra.mxu0 0.0
      %412 = vmatprep.subr.mxu0 0.0
      %413 = vmatpush2.msra.mxu0 0.0
      %414 = vmatprep.subr.mxu0 0.0
      %415 = vmatpush2.msra.mxu0 0.0
      %416 = vmatprep.subr.mxu0 0.0
      %417 = vmatpush2.msra.mxu0 0.0
      %418 = vmatprep.subr.mxu0 0.0
      %419 = vmatpush2.msra.mxu0 0.0
      %420 = vmatprep.subr.mxu0 0.0
      %421 = vmatpush2.msra.mxu0 0.0
      %422 = vmatprep.subr.mxu0 0.0
      %423 = vmatpush2.msra.mxu0 0.0
      %424 = vmatprep.subr.mxu0 0.0
      %425 = vmatpush2.msra.mxu0 0.0
      %426 = vmatprep.subr.mxu0 0.0
      %427 = vmatpush2.msra.mxu0 0.0
      %428 = vmatprep.subr.mxu0 0.0
      %429 = vmatpush2.msra.mxu0 0.0
      %430 = vmatprep.subr.mxu0 0.0
      %431 = vmatpush2.msra.mxu0 0.0
      %432 = vmatprep.subr.mxu0 0.0
      %433 = vmatpush2.msra.mxu0 0.0
      %434 = vmatprep.mubr.f32.mxu0 0.0
      %435 = vmatmul.mubr.f32.gmra.mxu0 %v319
      %v436 = vpop.f32.mrf.mxu0
      %v437 = vadd.f32 0.0, %v436
      %v438 = vpop.f32.mrf.mxu0
      %439 = vmatprep.mubr.f32.mxu0 0.0
      %440 = vmatmul.mubr.f32.gmra.mxu0 %v322
      %v441 = vpop.f32.mrf.mxu0
      %v442 = vadd.f32 0.0, %v441
      %v443 = vpop.f32.mrf.mxu0
      %444 = vmatprep.mubr.f32.mxu0 0.0
      %445 = vmatmul.mubr.f32.gmra.mxu0 %v325
      %v446 = vpop.f32.mrf.mxu0
      %v447 = vadd.f32 0.0, %v446
      %v448 = vpop.f32.mrf.mxu0
      %449 = vmatprep.mubr.f32.mxu0 0.0
      %450 = vmatmul.mubr.f32.gmra.mxu0 %v328
      %v451 = vpop.f32.mrf.mxu0
      %v452 = vadd.f32 0.0, %v451
      %v453 = vpop.f32.mrf.mxu0
      %454 = vmatprep.mubr.f32.mxu0 0.0
      %455 = vmatmul.mubr.f32.gmra.mxu0 %v331
      %v456 = vpop.f32.mrf.mxu0
      %v457 = vadd.f32 0.0, %v456
      %v458 = vpop.f32.mrf.mxu0
      %459 = vmatprep.mubr.f32.mxu0 0.0
      %460 = vmatmul.mubr.f32.gmra.mxu0 %v334
      %v461 = vpop.f32.mrf.mxu0
      %v462 = vadd.f32 0.0, %v461
      %v463 = vpop.f32.mrf.mxu0
      %464 = vmatprep.mubr.f32.mxu0 0.0
      %465 = vmatmul.mubr.f32.gmra.mxu0 %v337
      %v466 = vpop.f32.mrf.mxu0
      %v467 = vadd.f32 0.0, %v466
      %v468 = vpop.f32.mrf.mxu0
      %469 = vmatprep.mubr.f32.mxu0 0.0
      %470 = vmatmul.mubr.f32.gmra.mxu0 %v340
      %v471 = vpop.f32.mrf.mxu0
      %v472 = vadd.f32 0.0, %v471
      %v473 = vpop.f32.mrf.mxu0
      %474 = vmatprep.mubr.f32.mxu0 0.0
      %475 = vmatmul.mubr.f32.gmra.mxu0 %v343
      %v476 = vpop.f32.mrf.mxu0
      %v477 = vadd.f32 0.0, %v476
      %v478 = vpop.f32.mrf.mxu0
      %479 = vmatprep.mubr.f32.mxu0 0.0
      %480 = vmatmul.mubr.f32.gmra.mxu0 %v346
      %v481 = vpop.f32.mrf.mxu0
      %v482 = vadd.f32 0.0, %v481
      %v483 = vpop.f32.mrf.mxu0
      %484 = vmatprep.mubr.f32.mxu0 0.0
      %485 = vmatmul.mubr.f32.gmra.mxu0 %v349
      %v486 = vpop.f32.mrf.mxu0
      %v487 = vadd.f32 0.0, %v486
      %v488 = vpop.f32.mrf.mxu0
      %489 = vmatprep.mubr.f32.mxu0 0.0
      %490 = vmatmul.mubr.f32.gmra.mxu0 %v352
      %v491 = vpop.f32.mrf.mxu0
      %v492 = vadd.f32 0.0, %v491
      %v493 = vpop.f32.mrf.mxu0
      %494 = vmatprep.mubr.f32.mxu0 0.0
      %495 = vmatmul.mubr.f32.gmra.mxu0 %v355
      %v496 = vpop.f32.mrf.mxu0
      %v497 = vadd.f32 0.0, %v496
      %v498 = vpop.f32.mrf.mxu0
      %499 = vmatprep.mubr.f32.mxu0 0.0
      %500 = vmatmul.mubr.f32.gmra.mxu0 %v358
      %v501 = vpop.f32.mrf.mxu0
      %v502 = vadd.f32 0.0, %v501
      %v503 = vpop.f32.mrf.mxu0
      %504 = vmatprep.mubr.f32.mxu0 0.0
      %505 = vmatmul.mubr.f32.gmra.mxu0 %v361
      %v506 = vpop.f32.mrf.mxu0
      %v507 = vadd.f32 0.0, %v506
      %v508 = vpop.f32.mrf.mxu0
      %509 = vmatprep.mubr.f32.mxu0 0.0
      %510 = vmatmul.mubr.f32.gmra.mxu0 %v364
      %v511 = vpop.f32.mrf.mxu0
      %v512 = vadd.f32 0.0, %v511
      %v513 = vpop.f32.mrf.mxu0
      %514 = vdwg.mxu0
      %v515 = vld [vmem:[%s2] sm:$0x1]
      %v517 = vlaneseq
      %v518 = vshrl.u32 %v517, 7
      %v519 = vsub.s32 0, %v518
      %v520 = vrot.slane %v515, %v519
      %v522 = vmul.f32 %v437, %v520
      %v523 = vmul.f32 %v442, %v520
      %v524 = vmul.f32 %v447, %v520
      %v525 = vmul.f32 %v452, %v520
      %v526 = vmul.f32 %v457, %v520
      %v527 = vmul.f32 %v462, %v520
      %v528 = vmul.f32 %v467, %v520
      %v529 = vmul.f32 %v472, %v520
      %v530 = vmul.f32 %v477, %v520
      %v531 = vmul.f32 %v482, %v520
      %v532 = vmul.f32 %v487, %v520
      %v533 = vmul.f32 %v492, %v520
      %v534 = vmul.f32 %v497, %v520
      %v535 = vmul.f32 %v502, %v520
      %v536 = vmul.f32 %v507, %v520
      %v537 = vmul.f32 %v512, %v520
      %v538 = vld [vmem:[%s3] sm:$0x1]
      %v540 = vlaneseq
      %v541 = vshrl.u32 %v540, 7
      %v542 = vsub.s32 0, %v541
      %v543 = vrot.slane %v538, %v542
      %v545 = vadd.f32 %v522, %v543
      %v546 = vadd.f32 %v523, %v543
      %v547 = vadd.f32 %v524, %v543
      %v548 = vadd.f32 %v525, %v543
      %v549 = vadd.f32 %v526, %v543
      %v550 = vadd.f32 %v527, %v543
      %v551 = vadd.f32 %v528, %v543
      %v552 = vadd.f32 %v529, %v543
      %v553 = vadd.f32 %v530, %v543
      %v554 = vadd.f32 %v531, %v543
      %v555 = vadd.f32 %v532, %v543
      %v556 = vadd.f32 %v533, %v543
      %v557 = vadd.f32 %v534, %v543
      %v558 = vadd.f32 %v535, %v543
      %v559 = vadd.f32 %v536, %v543
      %v560 = vadd.f32 %v537, %v543
      %v561 = vld [vmem:[%s4] sm:$0x1]
      %v563 = vlaneseq
      %v564 = vshrl.u32 %v563, 7
      %v565 = vsub.s32 0, %v564
      %v566 = vrot.slane %v561, %v565
      %v568 = vmul.f32 %v437, %v566
      %v569 = vmul.f32 %v442, %v566
      %v570 = vmul.f32 %v447, %v566
      %v571 = vmul.f32 %v452, %v566
      %v572 = vmul.f32 %v457, %v566
      %v573 = vmul.f32 %v462, %v566
      %v574 = vmul.f32 %v467, %v566
      %v575 = vmul.f32 %v472, %v566
      %v576 = vmul.f32 %v477, %v566
      %v577 = vmul.f32 %v482, %v566
      %v578 = vmul.f32 %v487, %v566
      %v579 = vmul.f32 %v492, %v566
      %v580 = vmul.f32 %v497, %v566
      %v581 = vmul.f32 %v502, %v566
      %v582 = vmul.f32 %v507, %v566
      %v583 = vmul.f32 %v512, %v566
      %v584 = vld [vmem:[%s5] sm:$0x1]
      %v586 = vlaneseq
      %v587 = vshrl.u32 %v586, 7
      %v588 = vsub.s32 0, %v587
      %v589 = vrot.slane %v584, %v588
      %v591 = vadd.f32 %v568, %v589
      %v592 = vadd.f32 %v569, %v589
      %v593 = vadd.f32 %v570, %v589
      %v594 = vadd.f32 %v571, %v589
      %v595 = vadd.f32 %v572, %v589
      %v596 = vadd.f32 %v573, %v589
      %v597 = vadd.f32 %v574, %v589
      %v598 = vadd.f32 %v575, %v589
      %v599 = vadd.f32 %v576, %v589
      %v600 = vadd.f32 %v577, %v589
      %v601 = vadd.f32 %v578, %v589
      %v602 = vadd.f32 %v579, %v589
      %v603 = vadd.f32 %v580, %v589
      %v604 = vadd.f32 %v581, %v589
      %v605 = vadd.f32 %v582, %v589
      %v606 = vadd.f32 %v583, %v589
      %vm607 = vcmp.gt.f32.partialorder %v591, 0.0
      %vm608 = vcmp.gt.f32.partialorder %v592, 0.0
      %vm609 = vcmp.gt.f32.partialorder %v593, 0.0
      %vm610 = vcmp.gt.f32.partialorder %v594, 0.0
      %vm611 = vcmp.gt.f32.partialorder %v595, 0.0
      %vm612 = vcmp.gt.f32.partialorder %v596, 0.0
      %vm613 = vcmp.gt.f32.partialorder %v597, 0.0
      %vm614 = vcmp.gt.f32.partialorder %v598, 0.0
      %vm615 = vcmp.gt.f32.partialorder %v599, 0.0
      %vm616 = vcmp.gt.f32.partialorder %v600, 0.0
      %vm617 = vcmp.gt.f32.partialorder %v601, 0.0
      %vm618 = vcmp.gt.f32.partialorder %v602, 0.0
      %vm619 = vcmp.gt.f32.partialorder %v603, 0.0
      %vm620 = vcmp.gt.f32.partialorder %v604, 0.0
      %vm621 = vcmp.gt.f32.partialorder %v605, 0.0
      %vm622 = vcmp.gt.f32.partialorder %v606, 0.0
      %v623 = vsel %vm607, %v545, 0.0
      %v624 = vsel %vm608, %v546, 0.0
      %v625 = vsel %vm609, %v547, 0.0
      %v626 = vsel %vm610, %v548, 0.0
      %v627 = vsel %vm611, %v549, 0.0
      %v628 = vsel %vm612, %v550, 0.0
      %v629 = vsel %vm613, %v551, 0.0
      %v630 = vsel %vm614, %v552, 0.0
      %v631 = vsel %vm615, %v553, 0.0
      %v632 = vsel %vm616, %v554, 0.0
      %v633 = vsel %vm617, %v555, 0.0
      %v634 = vsel %vm618, %v556, 0.0
      %v635 = vsel %vm619, %v557, 0.0
      %v636 = vsel %vm620, %v558, 0.0
      %v637 = vsel %vm621, %v559, 0.0
      %v638 = vsel %vm622, %v560, 0.0
      %vm639 = vcmask 64512
      %640 = vst.msk [vmem:[%s288] sm:$0xff] %vm639, %v623
      %641 = vst.msk [vmem:[%s288 + $0x8] sm:$0xff] %vm639, %v624
      %642 = vst.msk [vmem:[%s288 + $0x10] sm:$0xff] %vm639, %v625
      %643 = vst.msk [vmem:[%s288 + $0x18] sm:$0xff] %vm639, %v626
      %644 = vst.msk [vmem:[%s288 + $0x20] sm:$0xff] %vm639, %v627
      %645 = vst.msk [vmem:[%s288 + $0x28] sm:$0xff] %vm639, %v628
      %646 = vst.msk [vmem:[%s288 + $0x30] sm:$0xff] %vm639, %v629
      %647 = vst.msk [vmem:[%s288 + $0x38] sm:$0xff] %vm639, %v630
      %648 = vst.msk [vmem:[%s288 + $0x40] sm:$0xff] %vm639, %v631
      %649 = vst.msk [vmem:[%s288 + $0x48] sm:$0xff] %vm639, %v632
      %650 = vst.msk [vmem:[%s288 + $0x50] sm:$0xff] %vm639, %v633
      %651 = vst.msk [vmem:[%s288 + $0x58] sm:$0xff] %vm639, %v634
      %652 = vst.msk [vmem:[%s288 + $0x60] sm:$0xff] %vm639, %v635
      %653 = vst.msk [vmem:[%s288 + $0x68] sm:$0xff] %vm639, %v636
      %654 = vst.msk [vmem:[%s288 + $0x70] sm:$0xff] %vm639, %v637
      %655 = vst.msk [vmem:[%s288 + $0x78] sm:$0xff] %vm639, %v638
      %v656 = vmax.f32 %v591, 0.0
      %v657 = vmax.f32 %v592, 0.0
      %v658 = vmax.f32 %v593, 0.0
      %v659 = vmax.f32 %v594, 0.0
      %v660 = vmax.f32 %v595, 0.0
      %v661 = vmax.f32 %v596, 0.0
      %v662 = vmax.f32 %v597, 0.0
      %v663 = vmax.f32 %v598, 0.0
      %v664 = vmax.f32 %v599, 0.0
      %v665 = vmax.f32 %v600, 0.0
      %v666 = vmax.f32 %v601, 0.0
      %v667 = vmax.f32 %v602, 0.0
      %v668 = vmax.f32 %v603, 0.0
      %v669 = vmax.f32 %v604, 0.0
      %v670 = vmax.f32 %v605, 0.0
      %v671 = vmax.f32 %v606, 0.0
      %672 = vst.msk [vmem:[%s294] sm:$0xff] %vm639, %v656
      %673 = vst.msk [vmem:[%s294 + $0x8] sm:$0xff] %vm639, %v657
      %674 = vst.msk [vmem:[%s294 + $0x10] sm:$0xff] %vm639, %v658
      %675 = vst.msk [vmem:[%s294 + $0x18] sm:$0xff] %vm639, %v659
      %676 = vst.msk [vmem:[%s294 + $0x20] sm:$0xff] %vm639, %v660
      %677 = vst.msk [vmem:[%s294 + $0x28] sm:$0xff] %vm639, %v661
      %678 = vst.msk [vmem:[%s294 + $0x30] sm:$0xff] %vm639, %v662
      %679 = vst.msk [vmem:[%s294 + $0x38] sm:$0xff] %vm639, %v663
      %680 = vst.msk [vmem:[%s294 + $0x40] sm:$0xff] %vm639, %v664
      %681 = vst.msk [vmem:[%s294 + $0x48] sm:$0xff] %vm639, %v665
      %682 = vst.msk [vmem:[%s294 + $0x50] sm:$0xff] %vm639, %v666
      %683 = vst.msk [vmem:[%s294 + $0x58] sm:$0xff] %vm639, %v667
      %684 = vst.msk [vmem:[%s294 + $0x60] sm:$0xff] %vm639, %v668
      %685 = vst.msk [vmem:[%s294 + $0x68] sm:$0xff] %vm639, %v669
      %686 = vst.msk [vmem:[%s294 + $0x70] sm:$0xff] %vm639, %v670
      %687 = vst.msk [vmem:[%s294 + $0x78] sm:$0xff] %vm639, %v671
      %s688 = smul.u32 16, %s19
      %p689 = scmp.lt.s32.totalorder %s688, 63
      %s690 = scalar_select %p689, %s688, 63
      %s691 = smul.addr %s690, 8
      %s692 = scalar_lea.vmem %s6, %s691
      %s693 = smul.u32 16, %s19
      %p694 = scmp.lt.s32.totalorder %s693, 63
      %s695 = scalar_select %p694, %s693, 63
      %s696 = smul.addr %s695, 8
      %s697 = scalar_lea.vmem %s7, %s696
      // Predicated region
      $region45: #{tpu_custom_call.1} parent=43 // pred_check
        %p698 = pneg %p168
      $region46: #{tpu_custom_call.1} parent=43 // pred_check_branch
        %700 = sbr.rel (%p698) target = $region48
      $region47: #{tpu_custom_call.1} parent=43 // pred_region
        %s701 = smul.u32 16, %s19
      $region48: #{tpu_custom_call.1} parent=43 // pred_fallthru
        _
      // Predicated region
      $region49: #{tpu_custom_call.1} parent=43 // pred_check
        %p702 = pneg %p194
      $region50: #{tpu_custom_call.1} parent=43 // pred_check_branch
        %704 = sbr.rel (%p702) target = $region52
      $region51: #{tpu_custom_call.1} parent=43 // pred_region
        %s705 = smul.u32 16, %s19
      $region52: #{tpu_custom_call.1} parent=43 // pred_fallthru
        _
    $region44: #{tpu_custom_call.1} parent=5 // pred_fallthru
      _
    %p706 = scmp.le.s32.totalorder 2, %s14
    // Predicated region
    $region53: #{tpu_custom_call.1} parent=5 // pred_check
      %p707 = pneg %p706
    $region54: #{tpu_custom_call.1} parent=5 // pred_check_branch
      %709 = sbr.rel (%p707) target = $region56
    $region55: #{tpu_custom_call.1} parent=5 // pred_region
      %s710 = ssub.s32 %s14, 2
      // Predicated region
      $region57: #{tpu_custom_call.1} parent=55 // pred_check
        %p711 = pneg %p174
      $region58: #{tpu_custom_call.1} parent=55 // pred_check_branch
        %713 = sbr.rel (%p711) target = $region60
      $region59: #{tpu_custom_call.1} parent=55 // pred_region
        %s714 = smul.u32 16, %s20
        %p715 = scmp.lt.s32.totalorder %s714, 63
        %s716 = scalar_select %p715, %s714, 63
        %s717 = smul.addr %s716, 8
        %s718 = scalar_lea.vmem %s6, %s717
      $region60: #{tpu_custom_call.1} parent=55 // pred_fallthru
        _
      // Predicated region
      $region61: #{tpu_custom_call.1} parent=55 // pred_check
        %p719 = pneg %p200
      $region62: #{tpu_custom_call.1} parent=55 // pred_check_branch
        %721 = sbr.rel (%p719) target = $region64
      $region63: #{tpu_custom_call.1} parent=55 // pred_region
        %s722 = smul.u32 16, %s20
        %p723 = scmp.lt.s32.totalorder %s722, 63
        %s724 = scalar_select %p723, %s722, 63
        %s725 = smul.addr %s724, 8
        %s726 = scalar_lea.vmem %s7, %s725
      $region64: #{tpu_custom_call.1} parent=55 // pred_fallthru
        _
    $region56: #{tpu_custom_call.1} parent=5 // pred_fallthru
      _
  $region6: #{tpu_custom_call.1} parent=0 // loop_footer
    %s18 = sadd.s32 1, %s14
  $region7: #{tpu_custom_call.1} parent=0 // loop_footer_branch
    %13 = sbr.rel target = $region3
  $region8: #{tpu_custom_call.1} parent=0 // loop_exit
    _

// kernel: tpu_custom_call.1
$region0: #{tpu_custom_call.1}
  #allocation0 [shape = 'u32[]', space=smem, size = 0x4, offset = 0x4, fixed_abs, tag = 'smem constant byte address 0x4 - core index']
  #allocation1 [shape = 'u32[144,128]{1,0:T(1,128)}', space=vmem, size = 0x12000, scoped, tag = 'internal scratch']
  %s0 = inlined_call_operand.vmem [shape: f32[512,36], index: 0, kind: input, shape index: {}]
  %s1 = inlined_call_operand.vmem [shape: f32[36,8], index: 1, kind: input, shape index: {}]
  %s2 = inlined_call_operand.vmem [shape: f32[1,8], index: 2, kind: input, shape index: {}]
  %s3 = inlined_call_operand.vmem [shape: f32[1,8], index: 3, kind: input, shape index: {}]
  %s4 = inlined_call_operand.vmem [shape: f32[1,8], index: 4, kind: input, shape index: {}]
  %s5 = inlined_call_operand.vmem [shape: f32[1,8], index: 5, kind: input, shape index: {}]
  %s6 = inlined_call_operand.vmem [shape: f32[512,8], index: 6, kind: output, shape index: {0}]
  %s7 = inlined_call_operand.vmem [shape: f32[512,8], index: 7, kind: output, shape index: {1}]
  %8 = xla_tuple %s6, %s7
  %s9 = sld [smem:[#allocation0]]
  $region65: #{tpu_custom_call.1} parent=0
    _
  %s11 = ssub.s32 1, %s9
  %s12 = scalar_select 0, %s11, %s9
  loop: start=0, step=1, limit=6
  $region2: #{tpu_custom_call.1} parent=0 // loop_pre_header
    _
  $region3: #{tpu_custom_call.1} parent=0 // loop_header
    %s14 = sphi 0, %s18
    %p15 = scmp.ge.s32.totalorder %s14, 6
    %s24 = sphi 0, %s26
    %s27 = sphi 0, %s24
    %s28 = sphi 0, %s27
    %s44 = sphi 0, %s28
    %s48 = sphi 0, %s48
    %s50 = sphi 0, %s48
    %s51 = sphi 0, %s50
    %s65 = sphi 0, %s51
    %s69 = sphi 0, %s69
    %s71 = sphi 0, %s69
    %s72 = sphi 0, %s71
    %s86 = sphi 0, %s72
    %s90 = sphi 0, %s90
    %s92 = sphi 0, %s90
    %s93 = sphi 0, %s92
    %s107 = sphi 0, %s93
    %s111 = sphi 0, %s111
    %s113 = sphi 0, %s111
    %s114 = sphi 0, %s113
    %s128 = sphi 0, %s114
    %s132 = sphi 0, %s132
    %s134 = sphi 0, %s132
    %s135 = sphi 0, %s134
    %s149 = sphi 0, %s135
    %s155 = sphi 0, %s157
    %s158 = sphi 0, %s155
    %s159 = sphi 0, %s158
    %s175 = sphi 0, %s159
    %s181 = sphi 0, %s183
    %s184 = sphi 0, %s181
    %s185 = sphi 0, %s184
    %s201 = sphi 0, %s185
  $region4: #{tpu_custom_call.1} parent=0 // loop_header_branch
    %17 = sbr.rel (%p15) target = $region8
  $region5: #{tpu_custom_call.1} parent=0 // loop_body
    %s19 = ssub.s32 %s14, 1
    %s20 = ssub.s32 %s14, 2
    %s21 = sadd.s32 %s14, 1
    %s22 = ssub.s32 %s14, %s21
    %p23 = scmp.eq.s32.totalorder %s22, 0
    %s25 = sadd.s32 %s24, 1
    %s26 = scalar_select %p23, %s24, %s25
    %p29 = pneg %p23
    %p30 = scmp.eq.s32.totalorder %s14, 3
    %p31 = por %p29, %p30
    %p32 = scmp.ne.s32.totalorder %s24, %s27
    %p33 = scmp.eq.s32.totalorder %s14, 0
    %p34 = por %p32, %p33
    %p35 = scmp.ne.s32.totalorder %s24, %s27
    %p36 = scmp.eq.s32.totalorder %s19, 3
    %p37 = por %p35, %p36
    %p38 = scmp.ne.s32.totalorder %s27, %s28
    %p39 = scmp.eq.s32.totalorder %s19, 0
    %p40 = por %p38, %p39
    %p41 = scmp.ne.s32.totalorder %s27, %s28
    %p42 = scmp.eq.s32.totalorder %s20, 3
    %p43 = por %p41, %p42
    %p45 = scmp.ne.s32.totalorder %s28, %s44
    %p46 = scmp.eq.s32.totalorder %s20, 0
    %p47 = por %p45, %p46
    %s49 = sadd.s32 %s48, 1
    %p52 = scmp.eq.s32.totalorder %s14, 3
    %p53 = scmp.ne.s32.totalorder %s48, %s50
    %p54 = scmp.eq.s32.totalorder %s14, 0
    %p55 = por %p53, %p54
    %p56 = scmp.ne.s32.totalorder %s48, %s50
    %p57 = scmp.eq.s32.totalorder %s19, 3
    %p58 = por %p56, %p57
    %p59 = scmp.ne.s32.totalorder %s50, %s51
    %p60 = scmp.eq.s32.totalorder %s19, 0
    %p61 = por %p59, %p60
    %p62 = scmp.ne.s32.totalorder %s50, %s51
    %p63 = scmp.eq.s32.totalorder %s20, 3
    %p64 = por %p62, %p63
    %p66 = scmp.ne.s32.totalorder %s51, %s65
    %p67 = scmp.eq.s32.totalorder %s20, 0
    %p68 = por %p66, %p67
    %s70 = sadd.s32 %s69, 1
    %p73 = scmp.eq.s32.totalorder %s14, 3
    %p74 = scmp.ne.s32.totalorder %s69, %s71
    %p75 = scmp.eq.s32.totalorder %s14, 0
    %p76 = por %p74, %p75
    %p77 = scmp.ne.s32.totalorder %s69, %s71
    %p78 = scmp.eq.s32.totalorder %s19, 3
    %p79 = por %p77, %p78
    %p80 = scmp.ne.s32.totalorder %s71, %s72
    %p81 = scmp.eq.s32.totalorder %s19, 0
    %p82 = por %p80, %p81
    %p83 = scmp.ne.s32.totalorder %s71, %s72
    %p84 = scmp.eq.s32.totalorder %s20, 3
    %p85 = por %p83, %p84
    %p87 = scmp.ne.s32.totalorder %s72, %s86
    %p88 = scmp.eq.s32.totalorder %s20, 0
    %p89 = por %p87, %p88
    %s91 = sadd.s32 %s90, 1
    %p94 = scmp.eq.s32.totalorder %s14, 3
    %p95 = scmp.ne.s32.totalorder %s90, %s92
    %p96 = scmp.eq.s32.totalorder %s14, 0
    %p97 = por %p95, %p96
    %p98 = scmp.ne.s32.totalorder %s90, %s92
    %p99 = scmp.eq.s32.totalorder %s19, 3
    %p100 = por %p98, %p99
    %p101 = scmp.ne.s32.totalorder %s92, %s93
    %p102 = scmp.eq.s32.totalorder %s19, 0
    %p103 = por %p101, %p102
    %p104 = scmp.ne.s32.totalorder %s92, %s93
    %p105 = scmp.eq.s32.totalorder %s20, 3
    %p106 = por %p104, %p105
    %p108 = scmp.ne.s32.totalorder %s93, %s107
    %p109 = scmp.eq.s32.totalorder %s20, 0
    %p110 = por %p108, %p109
    %s112 = sadd.s32 %s111, 1
    %p115 = scmp.eq.s32.totalorder %s14, 3
    %p116 = scmp.ne.s32.totalorder %s111, %s113
    %p117 = scmp.eq.s32.totalorder %s14, 0
    %p118 = por %p116, %p117
    %p119 = scmp.ne.s32.totalorder %s111, %s113
    %p120 = scmp.eq.s32.totalorder %s19, 3
    %p121 = por %p119, %p120
    %p122 = scmp.ne.s32.totalorder %s113, %s114
    %p123 = scmp.eq.s32.totalorder %s19, 0
    %p124 = por %p122, %p123
    %p125 = scmp.ne.s32.totalorder %s113, %s114
    %p126 = scmp.eq.s32.totalorder %s20, 3
    %p127 = por %p125, %p126
    %p129 = scmp.ne.s32.totalorder %s114, %s128
    %p130 = scmp.eq.s32.totalorder %s20, 0
    %p131 = por %p129, %p130
    %s133 = sadd.s32 %s132, 1
    %p136 = scmp.eq.s32.totalorder %s14, 3
    %p137 = scmp.ne.s32.totalorder %s132, %s134
    %p138 = scmp.eq.s32.totalorder %s14, 0
    %p139 = por %p137, %p138
    %p140 = scmp.ne.s32.totalorder %s132, %s134
    %p141 = scmp.eq.s32.totalorder %s19, 3
    %p142 = por %p140, %p141
    %p143 = scmp.ne.s32.totalorder %s134, %s135
    %p144 = scmp.eq.s32.totalorder %s19, 0
    %p145 = por %p143, %p144
    %p146 = scmp.ne.s32.totalorder %s134, %s135
    %p147 = scmp.eq.s32.totalorder %s20, 3
    %p148 = por %p146, %p147
    %p150 = scmp.ne.s32.totalorder %s135, %s149
    %p151 = scmp.eq.s32.totalorder %s20, 0
    %p152 = por %p150, %p151
    %s153 = ssub.s32 %s14, %s21
    %p154 = scmp.eq.s32.totalorder %s153, 0
    %s156 = sadd.s32 %s155, 1
    %s157 = scalar_select %p154, %s155, %s156
    %p160 = pneg %p154
    %p161 = scmp.eq.s32.totalorder %s14, 3
    %p162 = por %p160, %p161
    %p163 = scmp.ne.s32.totalorder %s155, %s158
    %p164 = scmp.eq.s32.totalorder %s14, 0
    %p165 = por %p163, %p164
    %p166 = scmp.ne.s32.totalorder %s155, %s158
    %p167 = scmp.eq.s32.totalorder %s19, 3
    %p168 = por %p166, %p167
    %p169 = scmp.ne.s32.totalorder %s158, %s159
    %p170 = scmp.eq.s32.totalorder %s19, 0
    %p171 = por %p169, %p170
    %p172 = scmp.ne.s32.totalorder %s158, %s159
    %p173 = scmp.eq.s32.totalorder %s20, 3
    %p174 = por %p172, %p173
    %p176 = scmp.ne.s32.totalorder %s159, %s175
    %p177 = scmp.eq.s32.totalorder %s20, 0
    %p178 = por %p176, %p177
    %s179 = ssub.s32 %s14, %s21
    %p180 = scmp.eq.s32.totalorder %s179, 0
    %s182 = sadd.s32 %s181, 1
    %s183 = scalar_select %p180, %s181, %s182
    %p186 = pneg %p180
    %p187 = scmp.eq.s32.totalorder %s14, 3
    %p188 = por %p186, %p187
    %p189 = scmp.ne.s32.totalorder %s181, %s184
    %p190 = scmp.eq.s32.totalorder %s14, 0
    %p191 = por %p189, %p190
    %p192 = scmp.ne.s32.totalorder %s181, %s184
    %p193 = scmp.eq.s32.totalorder %s19, 3
    %p194 = por %p192, %p193
    %p195 = scmp.ne.s32.totalorder %s184, %s185
    %p196 = scmp.eq.s32.totalorder %s19, 0
    %p197 = por %p195, %p196
    %p198 = scmp.ne.s32.totalorder %s184, %s185
    %p199 = scmp.eq.s32.totalorder %s20, 3
    %p200 = por %p198, %p199
    %p202 = scmp.ne.s32.totalorder %s185, %s201
    %p203 = scmp.eq.s32.totalorder %s20, 0
    %p204 = por %p202, %p203
    %p205 = scmp.le.s32.totalorder 1, %s14
    %p206 = scmp.lt.s32.totalorder %s14, 5
    %p207 = pnand %p205, %p206
    %p208 = pneg %p207
    // Predicated region
    $region9: #{tpu_custom_call.1} parent=5 // pred_check
      _
    $region10: #{tpu_custom_call.1} parent=5 // pred_check_branch
      %210 = sbr.rel (%p207) target = $region12
    $region11: #{tpu_custom_call.1} parent=5 // pred_region
      %s211 = ssub.s32 %s14, 1
      // Predicated region
      $region13: #{tpu_custom_call.1} parent=11 // pred_check
        %p212 = pneg %p61
      $region14: #{tpu_custom_call.1} parent=11 // pred_check_branch
        %214 = sbr.rel (%p212) target = $region16
      $region15: #{tpu_custom_call.1} parent=11 // pred_region
        _
      $region16: #{tpu_custom_call.1} parent=11 // pred_fallthru
        _
      // Predicated region
      $region17: #{tpu_custom_call.1} parent=11 // pred_check
        %p215 = pneg %p82
      $region18: #{tpu_custom_call.1} parent=11 // pred_check_branch
        %217 = sbr.rel (%p215) target = $region20
      $region19: #{tpu_custom_call.1} parent=11 // pred_region
        _
      $region20: #{tpu_custom_call.1} parent=11 // pred_fallthru
        _
      // Predicated region
      $region21: #{tpu_custom_call.1} parent=11 // pred_check
        %p218 = pneg %p103
      $region22: #{tpu_custom_call.1} parent=11 // pred_check_branch
        %220 = sbr.rel (%p218) target = $region24
      $region23: #{tpu_custom_call.1} parent=11 // pred_region
        _
      $region24: #{tpu_custom_call.1} parent=11 // pred_fallthru
        _
      // Predicated region
      $region25: #{tpu_custom_call.1} parent=11 // pred_check
        %p221 = pneg %p124
      $region26: #{tpu_custom_call.1} parent=11 // pred_check_branch
        %223 = sbr.rel (%p221) target = $region28
      $region27: #{tpu_custom_call.1} parent=11 // pred_region
        _
      $region28: #{tpu_custom_call.1} parent=11 // pred_fallthru
        _
      // Predicated region
      $region29: #{tpu_custom_call.1} parent=11 // pred_check
        %p224 = pneg %p145
      $region30: #{tpu_custom_call.1} parent=11 // pred_check_branch
        %226 = sbr.rel (%p224) target = $region32
      $region31: #{tpu_custom_call.1} parent=11 // pred_region
        _
      $region32: #{tpu_custom_call.1} parent=11 // pred_fallthru
        _
    $region12: #{tpu_custom_call.1} parent=5 // pred_fallthru
      _
    %p227 = scmp.lt.s32.totalorder %s14, 4
    // Predicated region
    $region33: #{tpu_custom_call.1} parent=5 // pred_check
      %p228 = pneg %p227
    $region34: #{tpu_custom_call.1} parent=5 // pred_check_branch
      %230 = sbr.rel (%p228) target = $region36
    $region35: #{tpu_custom_call.1} parent=5 // pred_region
      // Predicated region
      $region37: #{tpu_custom_call.1} parent=35 // pred_check
        %p231 = pneg %p34
      $region38: #{tpu_custom_call.1} parent=35 // pred_check_branch
        %233 = sbr.rel (%p231) target = $region40
      $region39: #{tpu_custom_call.1} parent=35 // pred_region
        %s234 = smul.u32 16, %s14
        %p235 = scmp.lt.s32.totalorder %s234, 63
        %s236 = scalar_select %p235, %s234, 63
        %s237 = smul.addr %s236, 8
        %s238 = scalar_lea.vmem %s0, %s237
        %s239 = smul.u32 16, %s14
      $region40: #{tpu_custom_call.1} parent=35 // pred_fallthru
        _
    $region36: #{tpu_custom_call.1} parent=5 // pred_fallthru
      _
    %p240 = scmp.le.s32.totalorder 1, %s14
    %p241 = scmp.lt.s32.totalorder %s14, 5
    %p242 = pnand %p240, %p241
    %p243 = pneg %p242
    // Predicated region
    $region41: #{tpu_custom_call.1} parent=5 // pred_check
      _
    $region42: #{tpu_custom_call.1} parent=5 // pred_check_branch
      %245 = sbr.rel (%p242) target = $region44
    $region43: #{tpu_custom_call.1} parent=5 // pred_region
      %s246 = ssub.s32 %s14, 1
      %s247 = smul.u32 16, %s19
      %p248 = scmp.lt.s32.totalorder %s247, 63
      %s249 = scalar_select %p248, %s247, 63
      %s250 = smul.addr %s249, 8
      %s251 = scalar_lea.vmem %s0, %s250
      %p252 = pneg %p40
      %p253 = pneg %p37
      %p254 = pneg %p61
      %p255 = pneg %p58
      %p256 = pneg %p82
      %p257 = pneg %p79
      %p258 = pneg %p103
      %p259 = pneg %p100
      %p260 = pneg %p124
      %p261 = pneg %p121
      %p262 = pneg %p145
      %p263 = pneg %p142
      %p264 = pneg %p171
      %p265 = pneg %p168
      %s266 = smul.u32 16, %s19
      %p267 = scmp.lt.s32.totalorder %s266, 63
      %s268 = scalar_select %p267, %s266, 63
      %s269 = smul.addr %s268, 8
      %s270 = scalar_lea.vmem %s6, %s269
      %p271 = pneg %p197
      %p272 = pneg %p194
      %s273 = smul.u32 16, %s19
      %p274 = scmp.lt.s32.totalorder %s273, 63
      %s275 = scalar_select %p274, %s273, 63
      %s276 = smul.addr %s275, 8
      %s277 = scalar_lea.vmem %s7, %s276
      %s278 = smul.u32 16, %s19
      %p279 = scmp.lt.s32.totalorder %s278, 63
      %s280 = scalar_select %p279, %s278, 63
      %s281 = smul.addr %s280, 8
      %s282 = scalar_lea.vmem %s0, %s281
      %s283 = smul.u32 16, %s19
      %s284 = smul.u32 16, %s19
      %p285 = scmp.lt.s32.totalorder %s284, 63
      %s286 = scalar_select %p285, %s284, 63
      %s287 = smul.addr %s286, 8
      %s288 = scalar_lea.vmem %s6, %s287
      %s289 = smul.u32 16, %s19
      %s290 = smul.u32 16, %s19
      %p291 = scmp.lt.s32.totalorder %s290, 63
      %s292 = scalar_select %p291, %s290, 63
      %s293 = smul.addr %s292, 8
      %s294 = scalar_lea.vmem %s7, %s293
      %s295 = smul.u32 16, %s19
      %v296 = vld [vmem:[%s282] sm:$0xff]
      %v297 = vld [vmem:[%s282 + $0x8] sm:$0xff]
      %v298 = vld [vmem:[%s282 + $0x10] sm:$0xff]
      %v299 = vld [vmem:[%s282 + $0x18] sm:$0xff]
      %v300 = vld [vmem:[%s282 + $0x20] sm:$0xff]
      %v301 = vld [vmem:[%s282 + $0x28] sm:$0xff]
      %v302 = vld [vmem:[%s282 + $0x30] sm:$0xff]
      %v303 = vld [vmem:[%s282 + $0x38] sm:$0xff]
      %v304 = vld [vmem:[%s282 + $0x40] sm:$0xff]
      %v305 = vld [vmem:[%s282 + $0x48] sm:$0xff]
      %v306 = vld [vmem:[%s282 + $0x50] sm:$0xff]
      %v307 = vld [vmem:[%s282 + $0x58] sm:$0xff]
      %v308 = vld [vmem:[%s282 + $0x60] sm:$0xff]
      %v309 = vld [vmem:[%s282 + $0x68] sm:$0xff]
      %v310 = vld [vmem:[%s282 + $0x70] sm:$0xff]
      %v311 = vld [vmem:[%s282 + $0x78] sm:$0xff]
      %v312 = vld [vmem:[%s1] sm:$0xff]
      %v313 = vld [vmem:[%s1 + $0x8] sm:$0xff]
      %v314 = vld [vmem:[%s1 + $0x10] sm:$0xff]
      %v315 = vld [vmem:[%s1 + $0x18] sm:$0xff]
      %v316 = vld [vmem:[%s1 + $0x20] sm:$0xf]
      %vm317 = vcmask 293888
      %v319 = vsel %vm317, %v296, 0
      %v322 = vsel %vm317, %v297, 0
      %v325 = vsel %vm317, %v298, 0
      %v328 = vsel %vm317, %v299, 0
      %v331 = vsel %vm317, %v300, 0
      %v334 = vsel %vm317, %v301, 0
      %v337 = vsel %vm317, %v302, 0
      %v340 = vsel %vm317, %v303, 0
      %v343 = vsel %vm317, %v304, 0
      %v346 = vsel %vm317, %v305, 0
      %v349 = vsel %vm317, %v306, 0
      %v352 = vsel %vm317, %v307, 0
      %v355 = vsel %vm317, %v308, 0
      %v358 = vsel %vm317, %v309, 0
      %v361 = vsel %vm317, %v310, 0
      %v364 = vsel %vm317, %v311, 0
      %vm366 = vcmask 1043456
      %v368 = vsel %vm366, %v316, 0
      %370 = vmatprep.subr.mxu0 0.0
      %371 = vmatpush1.msra.mxu0 0.0
      %372 = vmatprep.subr.mxu0 0.0
      %373 = vmatpush1.msra.mxu0 0.0
      %374 = vmatprep.subr.mxu0 0.0
      %375 = vmatpush1.msra.mxu0 0.0
      %376 = vmatprep.subr.mxu0 0.0
      %377 = vmatpush1.msra.mxu0 0.0
      %378 = vmatprep.subr.mxu0 0.0
      %379 = vmatpush1.msra.mxu0 0.0
      %380 = vmatprep.subr.mxu0 0.0
      %381 = vmatpush1.msra.mxu0 0.0
      %382 = vmatprep.subr.mxu0 0.0
      %383 = vmatpush1.msra.mxu0 0.0
      %384 = vmatprep.subr.mxu0 0.0
      %385 = vmatpush1.msra.mxu0 0.0
      %386 = vmatprep.subr.mxu0 0.0
      %387 = vmatpush1.msra.mxu0 0.0
      %388 = vmatprep.subr.mxu0 0.0
      %389 = vmatpush1.msra.mxu0 0.0
      %390 = vmatprep.subr.mxu0 0.0
      %391 = vmatpush1.msra.mxu0 0.0
      %392 = vmatprep.subr.mxu0 0.0
      %393 = vmatpush1.msra.mxu0 %v368
      %394 = vmatprep.subr.mxu0 0.0
      %395 = vmatpush1.msra.mxu0 %v315
      %396 = vmatprep.subr.mxu0 0.0
      %397 = vmatpush1.msra.mxu0 %v314
      %398 = vmatprep.subr.mxu0 0.0
      %399 = vmatpush1.msra.mxu0 %v313
      %400 = vmatprep.subr.mxu0 0.0
      %401 = vmatpush1.msra.mxu0 %v312
      %402 = vmatprep.subr.mxu0 0.0
      %403 = vmatpush2.msra.mxu0 0.0
      %404 = vmatprep.subr.mxu0 0.0
      %405 = vmatpush2.msra.mxu0 0.0
      %406 = vmatprep.subr.mxu0 0.0
      %407 = vmatpush2.msra.mxu0 0.0
      %408 = vmatprep.subr.mxu0 0.0
      %409 = vmatpush2.msra.mxu0 0.0
      %410 = vmatprep.subr.mxu0 0.0
      %411 = vmatpush2.msra.mxu0 0.0
      %412 = vmatprep.subr.mxu0 0.0
      %413 = vmatpush2.msra.mxu0 0.0
      %414 = vmatprep.subr.mxu0 0.0
      %415 = vmatpush2.msra.mxu0 0.0
      %416 = vmatprep.subr.mxu0 0.0
      %417 = vmatpush2.msra.mxu0 0.0
      %418 = vmatprep.subr.mxu0 0.0
      %419 = vmatpush2.msra.mxu0 0.0
      %420 = vmatprep.subr.mxu0 0.0
      %421 = vmatpush2.msra.mxu0 0.0
      %422 = vmatprep.subr.mxu0 0.0
      %423 = vmatpush2.msra.mxu0 0.0
      %424 = vmatprep.subr.mxu0 0.0
      %425 = vmatpush2.msra.mxu0 0.0
      %426 = vmatprep.subr.mxu0 0.0
      %427 = vmatpush2.msra.mxu0 0.0
      %428 = vmatprep.subr.mxu0 0.0
      %429 = vmatpush2.msra.mxu0 0.0
      %430 = vmatprep.subr.mxu0 0.0
      %431 = vmatpush2.msra.mxu0 0.0
      %432 = vmatprep.subr.mxu0 0.0
      %433 = vmatpush2.msra.mxu0 0.0
      %434 = vmatprep.mubr.f32.mxu0 0.0
      %435 = vmatmul.mubr.f32.gmra.mxu0 %v319
      %v436 = vpop.f32.mrf.mxu0
      %v437 = vadd.f32 0.0, %v436
      %v438 = vpop.f32.mrf.mxu0
      %439 = vmatprep.mubr.f32.mxu0 0.0
      %440 = vmatmul.mubr.f32.gmra.mxu0 %v322
      %v441 = vpop.f32.mrf.mxu0
      %v442 = vadd.f32 0.0, %v441
      %v443 = vpop.f32.mrf.mxu0
      %444 = vmatprep.mubr.f32.mxu0 0.0
      %445 = vmatmul.mubr.f32.gmra.mxu0 %v325
      %v446 = vpop.f32.mrf.mxu0
      %v447 = vadd.f32 0.0, %v446
      %v448 = vpop.f32.mrf.mxu0
      %449 = vmatprep.mubr.f32.mxu0 0.0
      %450 = vmatmul.mubr.f32.gmra.mxu0 %v328
      %v451 = vpop.f32.mrf.mxu0
      %v452 = vadd.f32 0.0, %v451
      %v453 = vpop.f32.mrf.mxu0
      %454 = vmatprep.mubr.f32.mxu0 0.0
      %455 = vmatmul.mubr.f32.gmra.mxu0 %v331
      %v456 = vpop.f32.mrf.mxu0
      %v457 = vadd.f32 0.0, %v456
      %v458 = vpop.f32.mrf.mxu0
      %459 = vmatprep.mubr.f32.mxu0 0.0
      %460 = vmatmul.mubr.f32.gmra.mxu0 %v334
      %v461 = vpop.f32.mrf.mxu0
      %v462 = vadd.f32 0.0, %v461
      %v463 = vpop.f32.mrf.mxu0
      %464 = vmatprep.mubr.f32.mxu0 0.0
      %465 = vmatmul.mubr.f32.gmra.mxu0 %v337
      %v466 = vpop.f32.mrf.mxu0
      %v467 = vadd.f32 0.0, %v466
      %v468 = vpop.f32.mrf.mxu0
      %469 = vmatprep.mubr.f32.mxu0 0.0
      %470 = vmatmul.mubr.f32.gmra.mxu0 %v340
      %v471 = vpop.f32.mrf.mxu0
      %v472 = vadd.f32 0.0, %v471
      %v473 = vpop.f32.mrf.mxu0
      %474 = vmatprep.mubr.f32.mxu0 0.0
      %475 = vmatmul.mubr.f32.gmra.mxu0 %v343
      %v476 = vpop.f32.mrf.mxu0
      %v477 = vadd.f32 0.0, %v476
      %v478 = vpop.f32.mrf.mxu0
      %479 = vmatprep.mubr.f32.mxu0 0.0
      %480 = vmatmul.mubr.f32.gmra.mxu0 %v346
      %v481 = vpop.f32.mrf.mxu0
      %v482 = vadd.f32 0.0, %v481
      %v483 = vpop.f32.mrf.mxu0
      %484 = vmatprep.mubr.f32.mxu0 0.0
      %485 = vmatmul.mubr.f32.gmra.mxu0 %v349
      %v486 = vpop.f32.mrf.mxu0
      %v487 = vadd.f32 0.0, %v486
      %v488 = vpop.f32.mrf.mxu0
      %489 = vmatprep.mubr.f32.mxu0 0.0
      %490 = vmatmul.mubr.f32.gmra.mxu0 %v352
      %v491 = vpop.f32.mrf.mxu0
      %v492 = vadd.f32 0.0, %v491
      %v493 = vpop.f32.mrf.mxu0
      %494 = vmatprep.mubr.f32.mxu0 0.0
      %495 = vmatmul.mubr.f32.gmra.mxu0 %v355
      %v496 = vpop.f32.mrf.mxu0
      %v497 = vadd.f32 0.0, %v496
      %v498 = vpop.f32.mrf.mxu0
      %499 = vmatprep.mubr.f32.mxu0 0.0
      %500 = vmatmul.mubr.f32.gmra.mxu0 %v358
      %v501 = vpop.f32.mrf.mxu0
      %v502 = vadd.f32 0.0, %v501
      %v503 = vpop.f32.mrf.mxu0
      %504 = vmatprep.mubr.f32.mxu0 0.0
      %505 = vmatmul.mubr.f32.gmra.mxu0 %v361
      %v506 = vpop.f32.mrf.mxu0
      %v507 = vadd.f32 0.0, %v506
      %v508 = vpop.f32.mrf.mxu0
      %509 = vmatprep.mubr.f32.mxu0 0.0
      %510 = vmatmul.mubr.f32.gmra.mxu0 %v364
      %v511 = vpop.f32.mrf.mxu0
      %v512 = vadd.f32 0.0, %v511
      %v513 = vpop.f32.mrf.mxu0
      %514 = vdwg.mxu0
      %v515 = vld [vmem:[%s2] sm:$0x1]
      %v517 = vlaneseq
      %v518 = vshrl.u32 %v517, 7
      %v519 = vsub.s32 0, %v518
      %v520 = vrot.slane %v515, %v519
      %v522 = vmul.f32 %v437, %v520
      %v523 = vmul.f32 %v442, %v520
      %v524 = vmul.f32 %v447, %v520
      %v525 = vmul.f32 %v452, %v520
      %v526 = vmul.f32 %v457, %v520
      %v527 = vmul.f32 %v462, %v520
      %v528 = vmul.f32 %v467, %v520
      %v529 = vmul.f32 %v472, %v520
      %v530 = vmul.f32 %v477, %v520
      %v531 = vmul.f32 %v482, %v520
      %v532 = vmul.f32 %v487, %v520
      %v533 = vmul.f32 %v492, %v520
      %v534 = vmul.f32 %v497, %v520
      %v535 = vmul.f32 %v502, %v520
      %v536 = vmul.f32 %v507, %v520
      %v537 = vmul.f32 %v512, %v520
      %v538 = vld [vmem:[%s3] sm:$0x1]
      %v540 = vlaneseq
      %v541 = vshrl.u32 %v540, 7
      %v542 = vsub.s32 0, %v541
      %v543 = vrot.slane %v538, %v542
      %v545 = vadd.f32 %v522, %v543
      %v546 = vadd.f32 %v523, %v543
      %v547 = vadd.f32 %v524, %v543
      %v548 = vadd.f32 %v525, %v543
      %v549 = vadd.f32 %v526, %v543
      %v550 = vadd.f32 %v527, %v543
      %v551 = vadd.f32 %v528, %v543
      %v552 = vadd.f32 %v529, %v543
      %v553 = vadd.f32 %v530, %v543
      %v554 = vadd.f32 %v531, %v543
      %v555 = vadd.f32 %v532, %v543
      %v556 = vadd.f32 %v533, %v543
      %v557 = vadd.f32 %v534, %v543
      %v558 = vadd.f32 %v535, %v543
      %v559 = vadd.f32 %v536, %v543
      %v560 = vadd.f32 %v537, %v543
      %v561 = vld [vmem:[%s4] sm:$0x1]
      %v563 = vlaneseq
      %v564 = vshrl.u32 %v563, 7
      %v565 = vsub.s32 0, %v564
      %v566 = vrot.slane %v561, %v565
      %v568 = vmul.f32 %v437, %v566
      %v569 = vmul.f32 %v442, %v566
      %v570 = vmul.f32 %v447, %v566
      %v571 = vmul.f32 %v452, %v566
      %v572 = vmul.f32 %v457, %v566
      %v573 = vmul.f32 %v462, %v566
      %v574 = vmul.f32 %v467, %v566
      %v575 = vmul.f32 %v472, %v566
      %v576 = vmul.f32 %v477, %v566
      %v577 = vmul.f32 %v482, %v566
      %v578 = vmul.f32 %v487, %v566
      %v579 = vmul.f32 %v492, %v566
      %v580 = vmul.f32 %v497, %v566
      %v581 = vmul.f32 %v502, %v566
      %v582 = vmul.f32 %v507, %v566
      %v583 = vmul.f32 %v512, %v566
      %v584 = vld [vmem:[%s5] sm:$0x1]
      %v586 = vlaneseq
      %v587 = vshrl.u32 %v586, 7
      %v588 = vsub.s32 0, %v587
      %v589 = vrot.slane %v584, %v588
      %v591 = vadd.f32 %v568, %v589
      %v592 = vadd.f32 %v569, %v589
      %v593 = vadd.f32 %v570, %v589
      %v594 = vadd.f32 %v571, %v589
      %v595 = vadd.f32 %v572, %v589
      %v596 = vadd.f32 %v573, %v589
      %v597 = vadd.f32 %v574, %v589
      %v598 = vadd.f32 %v575, %v589
      %v599 = vadd.f32 %v576, %v589
      %v600 = vadd.f32 %v577, %v589
      %v601 = vadd.f32 %v578, %v589
      %v602 = vadd.f32 %v579, %v589
      %v603 = vadd.f32 %v580, %v589
      %v604 = vadd.f32 %v581, %v589
      %v605 = vadd.f32 %v582, %v589
      %v606 = vadd.f32 %v583, %v589
      %vm607 = vcmp.gt.f32.partialorder %v591, 0.0
      %vm608 = vcmp.gt.f32.partialorder %v592, 0.0
      %vm609 = vcmp.gt.f32.partialorder %v593, 0.0
      %vm610 = vcmp.gt.f32.partialorder %v594, 0.0
      %vm611 = vcmp.gt.f32.partialorder %v595, 0.0
      %vm612 = vcmp.gt.f32.partialorder %v596, 0.0
      %vm613 = vcmp.gt.f32.partialorder %v597, 0.0
      %vm614 = vcmp.gt.f32.partialorder %v598, 0.0
      %vm615 = vcmp.gt.f32.partialorder %v599, 0.0
      %vm616 = vcmp.gt.f32.partialorder %v600, 0.0
      %vm617 = vcmp.gt.f32.partialorder %v601, 0.0
      %vm618 = vcmp.gt.f32.partialorder %v602, 0.0
      %vm619 = vcmp.gt.f32.partialorder %v603, 0.0
      %vm620 = vcmp.gt.f32.partialorder %v604, 0.0
      %vm621 = vcmp.gt.f32.partialorder %v605, 0.0
      %vm622 = vcmp.gt.f32.partialorder %v606, 0.0
      %v623 = vsel %vm607, %v545, 0.0
      %v624 = vsel %vm608, %v546, 0.0
      %v625 = vsel %vm609, %v547, 0.0
      %v626 = vsel %vm610, %v548, 0.0
      %v627 = vsel %vm611, %v549, 0.0
      %v628 = vsel %vm612, %v550, 0.0
      %v629 = vsel %vm613, %v551, 0.0
      %v630 = vsel %vm614, %v552, 0.0
      %v631 = vsel %vm615, %v553, 0.0
      %v632 = vsel %vm616, %v554, 0.0
      %v633 = vsel %vm617, %v555, 0.0
      %v634 = vsel %vm618, %v556, 0.0
      %v635 = vsel %vm619, %v557, 0.0
      %v636 = vsel %vm620, %v558, 0.0
      %v637 = vsel %vm621, %v559, 0.0
      %v638 = vsel %vm622, %v560, 0.0
      %vm639 = vcmask 64512
      %640 = vst.msk [vmem:[%s288] sm:$0xff] %vm639, %v623
      %641 = vst.msk [vmem:[%s288 + $0x8] sm:$0xff] %vm639, %v624
      %642 = vst.msk [vmem:[%s288 + $0x10] sm:$0xff] %vm639, %v625
      %643 = vst.msk [vmem:[%s288 + $0x18] sm:$0xff] %vm639, %v626
      %644 = vst.msk [vmem:[%s288 + $0x20] sm:$0xff] %vm639, %v627
      %645 = vst.msk [vmem:[%s288 + $0x28] sm:$0xff] %vm639, %v628
      %646 = vst.msk [vmem:[%s288 + $0x30] sm:$0xff] %vm639, %v629
      %647 = vst.msk [vmem:[%s288 + $0x38] sm:$0xff] %vm639, %v630
      %648 = vst.msk [vmem:[%s288 + $0x40] sm:$0xff] %vm639, %v631
      %649 = vst.msk [vmem:[%s288 + $0x48] sm:$0xff] %vm639, %v632
      %650 = vst.msk [vmem:[%s288 + $0x50] sm:$0xff] %vm639, %v633
      %651 = vst.msk [vmem:[%s288 + $0x58] sm:$0xff] %vm639, %v634
      %652 = vst.msk [vmem:[%s288 + $0x60] sm:$0xff] %vm639, %v635
      %653 = vst.msk [vmem:[%s288 + $0x68] sm:$0xff] %vm639, %v636
      %654 = vst.msk [vmem:[%s288 + $0x70] sm:$0xff] %vm639, %v637
      %655 = vst.msk [vmem:[%s288 + $0x78] sm:$0xff] %vm639, %v638
      %v656 = vmax.f32 %v591, 0.0
      %v657 = vmax.f32 %v592, 0.0
      %v658 = vmax.f32 %v593, 0.0
      %v659 = vmax.f32 %v594, 0.0
      %v660 = vmax.f32 %v595, 0.0
      %v661 = vmax.f32 %v596, 0.0
      %v662 = vmax.f32 %v597, 0.0
      %v663 = vmax.f32 %v598, 0.0
      %v664 = vmax.f32 %v599, 0.0
      %v665 = vmax.f32 %v600, 0.0
      %v666 = vmax.f32 %v601, 0.0
      %v667 = vmax.f32 %v602, 0.0
      %v668 = vmax.f32 %v603, 0.0
      %v669 = vmax.f32 %v604, 0.0
      %v670 = vmax.f32 %v605, 0.0
      %v671 = vmax.f32 %v606, 0.0
      %672 = vst.msk [vmem:[%s294] sm:$0xff] %vm639, %v656
      %673 = vst.msk [vmem:[%s294 + $0x8] sm:$0xff] %vm639, %v657
      %674 = vst.msk [vmem:[%s294 + $0x10] sm:$0xff] %vm639, %v658
      %675 = vst.msk [vmem:[%s294 + $0x18] sm:$0xff] %vm639, %v659
      %676 = vst.msk [vmem:[%s294 + $0x20] sm:$0xff] %vm639, %v660
      %677 = vst.msk [vmem:[%s294 + $0x28] sm:$0xff] %vm639, %v661
      %678 = vst.msk [vmem:[%s294 + $0x30] sm:$0xff] %vm639, %v662
      %679 = vst.msk [vmem:[%s294 + $0x38] sm:$0xff] %vm639, %v663
      %680 = vst.msk [vmem:[%s294 + $0x40] sm:$0xff] %vm639, %v664
      %681 = vst.msk [vmem:[%s294 + $0x48] sm:$0xff] %vm639, %v665
      %682 = vst.msk [vmem:[%s294 + $0x50] sm:$0xff] %vm639, %v666
      %683 = vst.msk [vmem:[%s294 + $0x58] sm:$0xff] %vm639, %v667
      %684 = vst.msk [vmem:[%s294 + $0x60] sm:$0xff] %vm639, %v668
      %685 = vst.msk [vmem:[%s294 + $0x68] sm:$0xff] %vm639, %v669
      %686 = vst.msk [vmem:[%s294 + $0x70] sm:$0xff] %vm639, %v670
      %687 = vst.msk [vmem:[%s294 + $0x78] sm:$0xff] %vm639, %v671
      %s688 = smul.u32 16, %s19
      %p689 = scmp.lt.s32.totalorder %s688, 63
      %s690 = scalar_select %p689, %s688, 63
      %s691 = smul.addr %s690, 8
      %s692 = scalar_lea.vmem %s6, %s691
      %s693 = smul.u32 16, %s19
      %p694 = scmp.lt.s32.totalorder %s693, 63
      %s695 = scalar_select %p694, %s693, 63
      %s696 = smul.addr %s695, 8
      %s697 = scalar_lea.vmem %s7, %s696
      // Predicated region
      $region45: #{tpu_custom_call.1} parent=43 // pred_check
        %p698 = pneg %p168
      $region46: #{tpu_custom_call.1} parent=43 // pred_check_branch
        %700 = sbr.rel (%p698) target = $region48
      $region47: #{tpu_custom_call.1} parent=43 // pred_region
        %s701 = smul.u32 16, %s19
      $region48: #{tpu_custom_call.1} parent=43 // pred_fallthru
        _
      // Predicated region
      $region49: #{tpu_custom_call.1} parent=43 // pred_check
        %p702 = pneg %p194
      $region50: #{tpu_custom_call.1} parent=43 // pred_check_branch
        %704 = sbr.rel (%p702) target = $region52
      $region51: #{tpu_custom_call.1} parent=43 // pred_region
        %s705 = smul.u32 16, %s19
      $region52: #{tpu_custom_call.1} parent=43 // pred_fallthru
        _
    $region44: #{tpu_custom_call.1} parent=5 // pred_fallthru
      _
    %p706 = scmp.le.s32.totalorder 2, %s14
    // Predicated region
    $region53: #{tpu_custom_call.1} parent=5 // pred_check
      %p707 = pneg %p706
    $region54: #{tpu_custom_call.1} parent=5 // pred_check_branch
      %709 = sbr.rel (%p707) target = $region56
    $region55: #{tpu_custom_call.1} parent=5 // pred_region
      %s710 = ssub.s32 %s14, 2
      // Predicated region
      $region57: #{tpu_custom_call.1} parent=55 // pred_check
        %p711 = pneg %p174
      $region58: #{tpu_custom_call.1} parent=55 // pred_check_branch
        %713 = sbr.rel (%p711) target = $region60
      $region59: #{tpu_custom_call.1} parent=55 // pred_region
        %s714 = smul.u32 16, %s20
        %p715 = scmp.lt.s32.totalorder %s714, 63
        %s716 = scalar_select %p715, %s714, 63
        %s717 = smul.addr %s716, 8
        %s718 = scalar_lea.vmem %s6, %s717
      $region60: #{tpu_custom_call.1} parent=55 // pred_fallthru
        _
      // Predicated region
      $region61: #{tpu_custom_call.1} parent=55 // pred_check
        %p719 = pneg %p200
      $region62: #{tpu_custom_call.1} parent=55 // pred_check_branch
        %721 = sbr.rel (%p719) target = $region64
      $region63: #{tpu_custom_call.1} parent=55 // pred_region
        %s722 = smul.u32 16, %s20
        %p723 = scmp.lt.s32.totalorder %s722, 63
        %s724 = scalar_select %p723, %s722, 63
        %s725 = smul.addr %s724, 8
        %s726 = scalar_lea.vmem %s7, %s725
      $region64: #{tpu_custom_call.1} parent=55 // pred_fallthru
        _
    $region56: #{tpu_custom_call.1} parent=5 // pred_fallthru
      _
  $region6: #{tpu_custom_call.1} parent=0 // loop_footer
    %s18 = sadd.s32 1, %s14
  $region7: #{tpu_custom_call.1} parent=0 // loop_footer_branch
    %13 = sbr.rel target = $region3
  $region8: #{tpu_custom_call.1} parent=0 // loop_exit
    _

</llo_original>
